<compile_context>
chip_gen: v7x
topology: tpu7x:2x2x1
jax: 0.10.0
libtpu: 0.0.40
codegen_flags: <defaults>
</compile_context>

<pallas_src>
import functools

import jax
import jax.numpy as jnp
from jax import lax
from jax.experimental import pallas as pl
from jax.experimental.pallas import tpu as pltpu

BN_EPS = 1e-5


# ---------------------------------------------------------------------------
# helpers
# ---------------------------------------------------------------------------

def _pick_tile(dim, cap, align=1):
    """Largest multiple of `align` <= cap that evenly divides `dim`.

    Falls back to `dim` itself (a full-extent block, always layout-legal) when
    no aligned divisor exists; correct, but VMEM-hungry for awkward sizes.
    """
    if dim <= cap:
        return dim
    t = (cap // align) * align
    while t >= align:
        if dim % t == 0:
            return t
        t -= align
    return dim


def _mosaic_params(dimension_semantics, vmem_estimate_bytes):
    """CompilerParams with an explicit scoped-VMEM limit.

    2x headroom over our own estimate, floored at the 32 MiB default and
    capped at 100 MiB (v5e/v6e physical VMEM is 128 MiB).  On v7x (64 MiB)
    keep th_cap / tile caps small enough that the estimate stays < ~48 MiB.
    """
    limit = int(min(max(2 * vmem_estimate_bytes, 32 * 1024 * 1024),
                    100 * 1024 * 1024))
    return pltpu.CompilerParams(dimension_semantics=dimension_semantics,
                                vmem_limit_bytes=limit)


# ---------------------------------------------------------------------------
# 1x1 conv + BN (+ ReLU) as a tiled matmul
# ---------------------------------------------------------------------------

def _matmul_bn_kernel(x_ref, w_ref, scale_ref, bias_ref, o_ref, acc_ref, *, relu):
    k = pl.program_id(1)

    @pl.when(k == 0)
    def _():
        acc_ref[...] = jnp.zeros_like(acc_ref)

    acc_ref[...] += jnp.dot(x_ref[...], w_ref[...],
                            preferred_element_type=jnp.float32)

    # Epilogue only on the final K step (keeps VPU/store work out of the loop).
    @pl.when(k == pl.num_programs(1) - 1)
    def _():
        y = acc_ref[...] * scale_ref[...] + bias_ref[...]
        if relu:
            y = jnp.maximum(y, 0.0)
        o_ref[...] = y.astype(o_ref.dtype)


def matmul_bn(x2d, w, scale, bias, *, relu, out_dtype=jnp.float32,
              tm_cap=1024, tk_cap=512):
    """(M, K) @ (K, Cout) with fused per-channel BN affine (+ optional ReLU)."""
    M, K = x2d.shape
    Kw, Cout = w.shape
    assert Kw == K
    tm = _pick_tile(M, tm_cap, 8)      # sublane-aligned M tiles
    tk = _pick_tile(K, tk_cap, 128)    # lane-aligned K tiles (or full K)
    grid = (M // tm, K // tk)
    out_isz = 2 if out_dtype == jnp.bfloat16 else 4
    est = (2 * tm * tk * 2 + 2 * tk * Cout * 2 + tm * Cout * 4
           + 2 * tm * Cout * out_isz + 8 * Cout * 4)
    return pl.pallas_call(
        functools.partial(_matmul_bn_kernel, relu=relu),
        out_shape=jax.ShapeDtypeStruct((M, Cout), out_dtype),
        grid=grid,
        in_specs=[
            pl.BlockSpec((tm, tk), lambda i, k: (i, k)),
            pl.BlockSpec((tk, Cout), lambda i, k: (k, 0)),
            pl.BlockSpec((1, Cout), lambda i, k: (0, 0)),
            pl.BlockSpec((1, Cout), lambda i, k: (0, 0)),
        ],
        out_specs=pl.BlockSpec((tm, Cout), lambda i, k: (i, 0)),
        scratch_shapes=[pltpu.VMEM((tm, Cout), jnp.float32)],
        compiler_params=_mosaic_params(("parallel", "arbitrary"), est),
    )(x2d.astype(jnp.bfloat16), w.astype(jnp.bfloat16),
      scale.reshape(1, -1).astype(jnp.float32),
      bias.reshape(1, -1).astype(jnp.float32))


# ---------------------------------------------------------------------------
# fused dilated 3x3 convs (d=6/12/18) + BN + ReLU
#   one double-buffered halo slab per row-tile feeds all three branches
# ---------------------------------------------------------------------------

def _dconv3_kernel(xp_hbm, w_ref, s_ref, b_ref, o2_ref, o3_ref, o4_ref,
                   slab, sem, acc_ref, *, TH, W, d_max, dils):
    n = pl.program_id(0)
    r = pl.program_id(1)
    num_r = pl.num_programs(1)
    rows = TH + 2 * d_max
    slot = lax.rem(r, 2)

    # Prime the pipeline at the first row-tile of each image.
    @pl.when(r == 0)
    def _():
        pltpu.make_async_copy(xp_hbm.at[n, pl.ds(r * TH, rows)],
                              slab.at[0], sem.at[0]).start()

    # Prefetch the next row-tile while this one is being computed.
    @pl.when(r + 1 < num_r)
    def _():
        pltpu.make_async_copy(xp_hbm.at[n, pl.ds((r + 1) * TH, rows)],
                              slab.at[1 - slot], sem.at[1 - slot]).start()

    # Wait for the current tile's slab.
    pltpu.make_async_copy(xp_hbm.at[n, pl.ds(r * TH, rows)],
                          slab.at[slot], sem.at[slot]).wait()

    # Apply all three dilation branches to the shared slab.
    for b, (d, o_ref) in enumerate(zip(dils, (o2_ref, o3_ref, o4_ref))):
        off = d_max - d
        first = True
        for kh in range(3):
            for kw in range(3):
                r0 = off + kh * d
                c0 = off + kw * d
                patch = slab[slot, r0:r0 + TH, c0:c0 + W, :]      # (TH, W, Cin)
                contrib = lax.dot_general(
                    patch, w_ref[b, kh, kw],
                    dimension_numbers=(((2,), (0,)), ((), ())),
                    preferred_element_type=jnp.float32)           # (TH, W, Cout)
                if first:
                    acc_ref[...] = contrib
                    first = False
                else:
                    acc_ref[...] += contrib
        y = acc_ref[...] * s_ref[b] + b_ref[b]
        o_ref[0] = jnp.maximum(y, 0.0).astype(o_ref.dtype)


def fused_dilated_conv3x3_bn_relu(xpad, w_stack, s_stack, b_stack, *,
                                  H, W, dils, d_max, th_cap=32):
    """xpad: (N, H+2*d_max, W+2*d_max, Cin) bf16 shared padded input.

    Returns three (N, H, W, Cout) bf16 arrays (one per dilation).
    """
    N = xpad.shape[0]
    Cin = xpad.shape[-1]
    Cout = w_stack.shape[-1]
    Wp = W + 2 * d_max
    TH = _pick_tile(H, th_cap, 1)
    rows = TH + 2 * d_max
    grid = (N, H // TH)

    est = (2 * rows * Wp * Cin * 2            # double-buffered slab (bf16)
           + 2 * 3 * 9 * Cin * Cout * 2       # stacked weights (x2 buffers)
           + TH * W * Cout * 4                # f32 accumulator
           + 3 * 2 * TH * W * Cout * 2        # 3 pipelined bf16 output blocks
           + 8 * Cout * 4)

    out_sds = jax.ShapeDtypeStruct((N, H, W, Cout), jnp.bfloat16)
    o_spec = pl.BlockSpec((1, TH, W, Cout), lambda n, r: (n, r, 0, 0))

    return pl.pallas_call(
        functools.partial(_dconv3_kernel, TH=TH, W=W, d_max=d_max,
                          dils=tuple(dils)),
        out_shape=(out_sds, out_sds, out_sds),
        grid=grid,
        in_specs=[
            pl.BlockSpec(memory_space=pl.ANY),                        # padded x in HBM
            pl.BlockSpec((3, 3, 3, Cin, Cout), lambda n, r: (0, 0, 0, 0, 0)),
            pl.BlockSpec((3, Cout), lambda n, r: (0, 0)),
            pl.BlockSpec((3, Cout), lambda n, r: (0, 0)),
        ],
        out_specs=(o_spec, o_spec, o_spec),
        scratch_shapes=[
            pltpu.VMEM((2, rows, Wp, Cin), jnp.bfloat16),   # double-buffered slab
            pltpu.SemaphoreType.DMA((2,)),
            pltpu.VMEM((TH, W, Cout), jnp.float32),         # tap accumulator
        ],
        # r axis must stay "arbitrary": the manual prime/prefetch chain assumes
        # sequential row-tiles; n is the megacore-parallel axis.
        compiler_params=_mosaic_params(("parallel", "arbitrary"), est),
    )(xpad, w_stack.astype(jnp.bfloat16),
      s_stack.astype(jnp.float32), b_stack.astype(jnp.float32))


# ---------------------------------------------------------------------------
# global average pool (adaptive avg pool to 1x1), tiled over HW
# ---------------------------------------------------------------------------

def _gap_kernel(x_ref, o_ref, *, inv_hw):
    r = pl.program_id(1)

    @pl.when(r == 0)
    def _():
        o_ref[...] = jnp.zeros_like(o_ref)

    o_ref[...] += jnp.sum(x_ref[...].astype(jnp.float32),
                          axis=1, keepdims=True) * inv_hw


def global_avg_pool(x_nhwc_flat, *, tr_cap=512):
    """x: (N, H*W, C) -> (N, 1, C) f32 mean over the spatial axis."""
    N, HW, C = x_nhwc_flat.shape
    TR = _pick_tile(HW, tr_cap, 8)
    grid = (N, HW // TR)
    est = 2 * TR * C * 2 + 2 * C * 4 + 4096
    return pl.pallas_call(
        functools.partial(_gap_kernel, inv_hw=1.0 / HW),
        out_shape=jax.ShapeDtypeStruct((N, 1, C), jnp.float32),
        grid=grid,
        in_specs=[pl.BlockSpec((1, TR, C), lambda n, r: (n, r, 0))],
        out_specs=pl.BlockSpec((1, 1, C), lambda n, r: (n, 0, 0)),
        compiler_params=_mosaic_params(("parallel", "arbitrary"), est),
    )(x_nhwc_flat)


# ---------------------------------------------------------------------------
# final 1x1 conv (5*Cout -> Cout) + BN with concat / broadcast eliminated
# ---------------------------------------------------------------------------

def _combine_kernel(x1_ref, x2_ref, x3_ref, x4_ref,
                    w14_ref, scale_ref, pb_ref, o_ref):
    acc = jnp.dot(x1_ref[0], w14_ref[0], preferred_element_type=jnp.float32)
    acc = acc + jnp.dot(x2_ref[0], w14_ref[1], preferred_element_type=jnp.float32)
    acc = acc + jnp.dot(x3_ref[0], w14_ref[2], preferred_element_type=jnp.float32)
    acc = acc + jnp.dot(x4_ref[0], w14_ref[3], preferred_element_type=jnp.float32)
    # pooled branch + BN bias are pre-folded into the per-batch term pb_ref.
    o_ref[0] = (acc * scale_ref[0] + pb_ref[0]).astype(o_ref.dtype)


def combine_final(x1, x2, x3, x4, w14, scale, pooled_bias, *, tm_cap=512):
    N, HW, Cout = x1.shape
    TM = _pick_tile(HW, tm_cap, 8)
    grid = (N, HW // TM)
    est = (4 * 2 * TM * Cout * 2 + 2 * 4 * Cout * Cout * 2
           + 2 * TM * Cout * 4 + 8 * Cout * 4)
    branch_spec = pl.BlockSpec((1, TM, Cout), lambda n, m: (n, m, 0))
    return pl.pallas_call(
        _combine_kernel,
        out_shape=jax.ShapeDtypeStruct((N, HW, Cout), jnp.float32),
        grid=grid,
        in_specs=[branch_spec, branch_spec, branch_spec, branch_spec,
                  pl.BlockSpec((4, Cout, Cout), lambda n, m: (0, 0, 0)),
                  pl.BlockSpec((1, 1, Cout), lambda n, m: (0, 0, 0)),
                  pl.BlockSpec((1, 1, Cout), lambda n, m: (n, 0, 0))],
        out_specs=pl.BlockSpec((1, TM, Cout), lambda n, m: (n, m, 0)),
        compiler_params=_mosaic_params(("parallel", "parallel"), est),
    )(x1.astype(jnp.bfloat16), x2.astype(jnp.bfloat16),
      x3.astype(jnp.bfloat16), x4.astype(jnp.bfloat16),
      w14.astype(jnp.bfloat16),
      scale.reshape(1, 1, -1).astype(jnp.float32),
      pooled_bias.astype(jnp.float32))


# ---------------------------------------------------------------------------
# parameters & forward
# ---------------------------------------------------------------------------

def init_params(key, in_channel, out_channel):
    ks = iter(jax.random.split(key, 32))

    def conv_w(shape, fan_in):
        return jax.random.normal(next(ks), shape, jnp.float32) / jnp.sqrt(float(fan_in))

    def bn(c):
        gamma = 1.0 + 0.1 * jax.random.normal(next(ks), (c,), jnp.float32)
        beta = 0.1 * jax.random.normal(next(ks), (c,), jnp.float32)
        mean = 0.1 * jax.random.normal(next(ks), (c,), jnp.float32)
        var = 0.5 + jax.nn.sigmoid(jax.random.normal(next(ks), (c,), jnp.float32))
        scale = gamma / jnp.sqrt(var + BN_EPS)
        bias = beta - mean * scale
        return scale, bias

    p = {}
    p['w1'] = conv_w((in_channel, out_channel), in_channel)              # aspp1 1x1
    p['s1'], p['b1'] = bn(out_channel)
    for idx in (2, 3, 4):                                                # aspp2..4 3x3 dilated
        p[f'w{idx}'] = conv_w((3, 3, in_channel, out_channel), 9 * in_channel)
        p[f's{idx}'], p[f'b{idx}'] = bn(out_channel)
    p['wp'] = conv_w((in_channel, out_channel), in_channel)              # pooled-branch 1x1
    p['sp'], p['bp'] = bn(out_channel)
    p['wc'] = conv_w((5 * out_channel, out_channel), 5 * out_channel)    # conv1
    p['sc'], p['bc'] = bn(out_channel)
    return p


def aspp_forward(x_nchw, params, dilations):
    N, Cin, H, W = x_nchw.shape
    HW = H * W
    Cout = params['w1'].shape[1]

    # NCHW -> NHWC, bf16 activations (MXU operands); one shared d_max pad.
    x = jnp.transpose(x_nchw, (0, 2, 3, 1)).astype(jnp.bfloat16)
    d_max = max(dilations[1:])
    # TODO(synk): replace the host-side zero pad with in-kernel halo handling
    # (edge-guarded DMAs into a zero-initialised slab) to avoid writing/reading
    # the d_max halo through HBM.
    xpad = jnp.pad(x, ((0, 0), (d_max, d_max), (d_max, d_max), (0, 0)))

    # aspp1: 1x1 conv + BN + ReLU (tiled matmul)
    x1 = matmul_bn(x.reshape(N * HW, Cin), params['w1'], params['s1'], params['b1'],
                   relu=True, out_dtype=jnp.bfloat16).reshape(N, HW, Cout)

    # aspp2..4: fused dilated 3x3 convs + BN + ReLU (one shared slab per tile)
    w_stack = jnp.stack([params['w2'], params['w3'], params['w4']], axis=0)
    s_stack = jnp.stack([params['s2'], params['s3'], params['s4']], axis=0)
    b_stack = jnp.stack([params['b2'], params['b3'], params['b4']], axis=0)
    x2, x3, x4 = fused_dilated_conv3x3_bn_relu(
        xpad, w_stack, s_stack, b_stack,
        H=H, W=W, dils=tuple(dilations[1:]), d_max=d_max)

    # global_avg_pool branch: pooled mean -> 1x1 conv -> BN -> ReLU
    pooled = global_avg_pool(x.reshape(N, HW, Cin))                    # (N, 1, Cin) f32
    x5 = matmul_bn(pooled.reshape(N, Cin), params['wp'], params['sp'], params['bp'],
                   relu=True, out_dtype=jnp.bfloat16)                  # (N, Cout)

    # conv1 + bn1: split wc per branch; the (spatially constant) pooled branch
    # is folded into a per-batch bias computed ONCE: (x5 @ wc_5)*sc + bc.
    wc = params['wc']
    w14 = wc[:4 * Cout, :].reshape(4, Cout, Cout)
    w5 = wc[4 * Cout:, :]
    pooled_bias = matmul_bn(x5, w5, params['sc'], params['bc'],
                            relu=False, out_dtype=jnp.float32)         # (N, Cout)

    y = combine_final(x1,
                      x2.reshape(N, HW, Cout), x3.reshape(N, HW, Cout),
                      x4.reshape(N, HW, Cout),
                      w14, params['sc'], pooled_bias.reshape(N, 1, Cout))

    return jnp.transpose(y.reshape(N, H, W, Cout), (0, 3, 1, 2))       # NHWC -> NCHW


# ---------------------------------------------------------------------------
# pure-JAX f32 reference (for verification)
# ---------------------------------------------------------------------------

def aspp_reference(x_nchw, params, dilations):
    x = jnp.transpose(x_nchw, (0, 2, 3, 1)).astype(jnp.float32)
    N, H, W, Cin = x.shape
    Cout = params['w1'].shape[1]

    def bn(y, s, b):
        return y * s + b

    def conv1x1(y, w):
        return lax.conv_general_dilated(y, w.reshape(1, 1, *w.shape), (1, 1), 'VALID',
                                        dimension_numbers=('NHWC', 'HWIO', 'NHWC'))

    def conv3x3(y, w, d):
        return lax.conv_general_dilated(y, w, (1, 1), [(d, d), (d, d)], rhs_dilation=(d, d),
                                        dimension_numbers=('NHWC', 'HWIO', 'NHWC'))

    x1 = jax.nn.relu(bn(conv1x1(x, params['w1']), params['s1'], params['b1']))
    x2 = jax.nn.relu(bn(conv3x3(x, params['w2'], dilations[1]), params['s2'], params['b2']))
    x3 = jax.nn.relu(bn(conv3x3(x, params['w3'], dilations[2]), params['s3'], params['b3']))
    x4 = jax.nn.relu(bn(conv3x3(x, params['w4'], dilations[3]), params['s4'], params['b4']))
    pooled = jnp.mean(x, axis=(1, 2), keepdims=True)
    x5 = jax.nn.relu(bn(conv1x1(pooled, params['wp']), params['sp'], params['bp']))
    x5 = jnp.broadcast_to(x5, (N, H, W, Cout))
    xc = jnp.concatenate([x1, x2, x3, x4, x5], axis=-1)
    y = bn(conv1x1(xc, params['wc']), params['sc'], params['bc'])
    return jnp.transpose(y, (0, 3, 1, 2))


if __name__ == "__main__":
    key = jax.random.PRNGKey(0)
    k_x, k_p = jax.random.split(key)

    N, Cin, H, W = 2, 8, 16, 16      # small synthetic stand-in for (N, 2048, H, W)
    Cout = 4                          # stand-in for 256
    output_strid = 16
    dilations = [1, 6, 12, 18] if output_strid == 16 else [1, 12, 24, 36]

    x = jax.random.normal(k_x, (N, Cin, H, W), jnp.float32)
    params = init_params(k_p, Cin, Cout)

    y = aspp_forward(x, params, dilations)
    y = jax.block_until_ready(y)
    assert y.shape == (N, Cout, H, W)

    y_ref = aspp_reference(x, params, dilations)
    max_err = float(jnp.max(jnp.abs(y - y_ref)))
    ref_scale = float(jnp.max(jnp.abs(y_ref)))
    # bf16 MXU operands (with f32 accumulation) loosen the tolerance vs f32.
    tol = 5e-2 * max(1.0, ref_scale)
    assert max_err < tol, f"mismatch vs reference: {max_err} (tol {tol})"

    print("KERNEL_OK")
</pallas_src>

<mosaic_0001>
module attributes {stable_mosaic.version = 11 : i64} {
  func.func @_matmul_bn_kernel(%arg0: i32, %arg1: i32, %arg2: memref<512x8xbf16, #tpu.memory_space<vmem>>, %arg3: memref<8x4xbf16, #tpu.memory_space<vmem>>, %arg4: memref<1x4xf32, #tpu.memory_space<vmem>>, %arg5: memref<1x4xf32, #tpu.memory_space<vmem>>, %arg6: memref<512x4xbf16, #tpu.memory_space<vmem>>, %arg7: memref<512x4xf32, #tpu.memory_space<vmem>>) attributes {dimension_semantics = [#tpu.dimension_semantics<parallel>, #tpu.dimension_semantics<arbitrary>], iteration_bounds = array<i64: 1, 1>, scalar_prefetch = 0 : i64, scratch_operands = 1 : i64, tpu.core_type = #tpu.core_type<tc>, window_params = [{transform_indices = @transform_0, window_bounds = array<i64: 512, 8>}, {transform_indices = @transform_1, window_bounds = array<i64: 8, 4>}, {pipeline_mode = #tpu.pipeline_mode<synchronous>, transform_indices = @transform_2, window_bounds = array<i64: 1, 4>}, {pipeline_mode = #tpu.pipeline_mode<synchronous>, transform_indices = @transform_3, window_bounds = array<i64: 1, 4>}, {transform_indices = @transform_4, window_bounds = array<i64: 512, 4>}]} {
    %c0_i32 = arith.constant 0 : i32
    %0 = arith.cmpi eq, %arg1, %c0_i32 : i32
    %1 = arith.extui %0 : i1 to i32
    %c0_i32_0 = arith.constant 0 : i32
    %2 = arith.cmpi ne, %1, %c0_i32_0 : i32
    scf.if %2 {
      %cst_10 = arith.constant 0.000000e+00 : f32
      %12 = vector.broadcast %cst_10 : f32 to vector<512x4xf32>
      %c0_11 = arith.constant 0 : index
      %c0_12 = arith.constant 0 : index
      %13 = vector.load %arg7[%c0_11, %c0_12] : memref<512x4xf32, #tpu.memory_space<vmem>>, vector<512x4xf32>
      tpu.vector_store %arg7[%c0_11, %c0_12], %12 {strides = array<i32>} : memref<512x4xf32, #tpu.memory_space<vmem>>, vector<512x4xf32>,
    } else {
    }
    %c0 = arith.constant 0 : index
    %c0_1 = arith.constant 0 : index
    %3 = vector.load %arg7[%c0, %c0_1] : memref<512x4xf32, #tpu.memory_space<vmem>>, vector<512x4xf32>
    %c0_2 = arith.constant 0 : index
    %c0_3 = arith.constant 0 : index
    %4 = vector.load %arg2[%c0_2, %c0_3] : memref<512x8xbf16, #tpu.memory_space<vmem>>, vector<512x8xbf16>
    %c0_4 = arith.constant 0 : index
    %c0_5 = arith.constant 0 : index
    %5 = vector.load %arg3[%c0_4, %c0_5] : memref<8x4xbf16, #tpu.memory_space<vmem>>, vector<8x4xbf16>
    %cst = arith.constant dense<0.000000e+00> : vector<512x4xf32>
    %6 = tpu.matmul %4, %5, %cst {dimension_numbers = #tpu.dot_dimension_numbers<[1], [0], [0], [1], [0, 0, 1, 1], [], []>} : vector<512x8xbf16>, vector<8x4xbf16>, vector<512x4xf32> -> vector<512x4xf32>
    %7 = arith.addf %3, %6 : vector<512x4xf32>
    %c0_6 = arith.constant 0 : index
    %c0_7 = arith.constant 0 : index
    %8 = vector.load %arg7[%c0_6, %c0_7] : memref<512x4xf32, #tpu.memory_space<vmem>>, vector<512x4xf32>
    tpu.vector_store %arg7[%c0_6, %c0_7], %7 {strides = array<i32>} : memref<512x4xf32, #tpu.memory_space<vmem>>, vector<512x4xf32>,
    %c0_i32_8 = arith.constant 0 : i32
    %9 = arith.cmpi eq, %arg1, %c0_i32_8 : i32
    %10 = arith.extui %9 : i1 to i32
    %c0_i32_9 = arith.constant 0 : i32
    %11 = arith.cmpi ne, %10, %c0_i32_9 : i32
    scf.if %11 {
      %c0_10 = arith.constant 0 : index
      %c0_11 = arith.constant 0 : index
      %12 = vector.load %arg7[%c0_10, %c0_11] : memref<512x4xf32, #tpu.memory_space<vmem>>, vector<512x4xf32>
      %c0_12 = arith.constant 0 : index
      %c0_13 = arith.constant 0 : index
      %13 = vector.load %arg4[%c0_12, %c0_13] : memref<1x4xf32, #tpu.memory_space<vmem>>, vector<1x4xf32>
      %14 = vector.broadcast %13 : vector<1x4xf32> to vector<512x4xf32>
      %15 = arith.mulf %12, %14 : vector<512x4xf32>
      %c0_14 = arith.constant 0 : index
      %c0_15 = arith.constant 0 : index
      %16 = vector.load %arg5[%c0_14, %c0_15] : memref<1x4xf32, #tpu.memory_space<vmem>>, vector<1x4xf32>
      %17 = vector.broadcast %16 : vector<1x4xf32> to vector<512x4xf32>
      %18 = arith.addf %15, %17 : vector<512x4xf32>
      %cst_16 = arith.constant 0.000000e+00 : f32
      %19 = vector.broadcast %cst_16 : f32 to vector<512x4xf32>
      %20 = arith.maximumf %18, %19 : vector<512x4xf32>
      %21 = arith.truncf %20 : vector<512x4xf32> to vector<512x4xbf16>
      %c0_17 = arith.constant 0 : index
      %c0_18 = arith.constant 0 : index
      %22 = vector.load %arg6[%c0_17, %c0_18] : memref<512x4xbf16, #tpu.memory_space<vmem>>, vector<512x4xbf16>
      tpu.vector_store %arg6[%c0_17, %c0_18], %21 {strides = array<i32>} : memref<512x4xbf16, #tpu.memory_space<vmem>>, vector<512x4xbf16>,
    } else {
    }
    return
  }
  func.func @transform_0(%arg0: i32, %arg1: i32) -> (i32, i32) {
    %c0_i32 = arith.constant 0 : i32
    return %arg0, %arg1 : i32, i32
  }
  func.func @transform_1(%arg0: i32, %arg1: i32) -> (i32, i32) {
    %c0_i32 = arith.constant 0 : i32
    %c0_i32_0 = arith.constant 0 : i32
    return %arg1, %c0_i32 : i32, i32
  }
  func.func @transform_2(%arg0: i32, %arg1: i32) -> (i32, i32) {
    %c0_i32 = arith.constant 0 : i32
    %c0_i32_0 = arith.constant 0 : i32
    %c0_i32_1 = arith.constant 0 : i32
    return %c0_i32, %c0_i32_0 : i32, i32
  }
  func.func @transform_3(%arg0: i32, %arg1: i32) -> (i32, i32) {
    %c0_i32 = arith.constant 0 : i32
    %c0_i32_0 = arith.constant 0 : i32
    %c0_i32_1 = arith.constant 0 : i32
    return %c0_i32, %c0_i32_0 : i32, i32
  }
  func.func @transform_4(%arg0: i32, %arg1: i32) -> (i32, i32) {
    %c0_i32 = arith.constant 0 : i32
    %c0_i32_0 = arith.constant 0 : i32
    return %arg0, %c0_i32 : i32, i32
  }
}

</mosaic_0001>

<llo_original>
// kernel: tpu_custom_call.1
$region0: #{tpu_custom_call.1}
  #allocation0 [shape = 'u32[]', space=smem, size = 0x4, offset = 0x4, fixed_abs, tag = 'smem constant byte address 0x4 - core index']
  #allocation1 [shape = 'u32[144,128]{1,0:T(1,128)}', space=vmem, size = 0x12000, scoped, tag = 'internal scratch']
  #allocation2 [shape = 'f32[512,4]{1,0:T(8,128)}', space=vmem, size = 0x40000, scoped, tag = 'scratch operand']
  %s0 = inlined_call_operand.vmem [shape: bf16[512,8], index: 0, kind: input, shape index: {}]
  %s1 = inlined_call_operand.vmem [shape: bf16[8,4], index: 1, kind: input, shape index: {}]
  %s2 = inlined_call_operand.vmem [shape: f32[1,4], index: 2, kind: input, shape index: {}]
  %s3 = inlined_call_operand.vmem [shape: f32[1,4], index: 3, kind: input, shape index: {}]
  %s4 = inlined_call_operand.vmem [shape: bf16[512,4], index: 4, kind: output, shape index: {}]
  %s5 = sld [smem:[#allocation0]]
  $region34: #{tpu_custom_call.1} parent=0
    _
  %s7 = ssub.s32 1, %s5
  %s8 = scalar_select 0, %s7, %s5
  // Predicated region
  $region2: #{tpu_custom_call.1} parent=0 // pred_check
    _
  $region3: #{tpu_custom_call.1} parent=0 // pred_check_branch
    %10 = sbr.rel (0) target = $region5
  $region4: #{tpu_custom_call.1} parent=0 // pred_region
    _
  $region5: #{tpu_custom_call.1} parent=0 // pred_fallthru
    _
  // Predicated region
  $region6: #{tpu_custom_call.1} parent=0 // pred_check
    _
  $region7: #{tpu_custom_call.1} parent=0 // pred_check_branch
    %12 = sbr.rel (0) target = $region9
  $region8: #{tpu_custom_call.1} parent=0 // pred_region
    _
  $region9: #{tpu_custom_call.1} parent=0 // pred_fallthru
    _
  // Predicated region
  $region10: #{tpu_custom_call.1} parent=0 // pred_check
    _
  $region11: #{tpu_custom_call.1} parent=0 // pred_check_branch
    %14 = sbr.rel (0) target = $region13
  $region12: #{tpu_custom_call.1} parent=0 // pred_region
    _
  $region13: #{tpu_custom_call.1} parent=0 // pred_fallthru
    _
  // Predicated region
  $region14: #{tpu_custom_call.1} parent=0 // pred_check
    _
  $region15: #{tpu_custom_call.1} parent=0 // pred_check_branch
    %16 = sbr.rel (0) target = $region17
  $region16: #{tpu_custom_call.1} parent=0 // pred_region
    _
  $region17: #{tpu_custom_call.1} parent=0 // pred_fallthru
    _
  %p18 = scmp.eq.s32.totalorder 0, 0
  // Predicated region
  $region18: #{tpu_custom_call.1} parent=0 // pred_check
    %p19 = pneg %p18
  $region19: #{tpu_custom_call.1} parent=0 // pred_check_branch
    %21 = sbr.rel (%p19) target = $region21
  $region20: #{tpu_custom_call.1} parent=0 // pred_region
    %vm22 = vcmask 31744
    %23 = vst.msk [vmem:[#allocation2] sm:$0xff] %vm22, 0.0
    %24 = vst.msk [vmem:[#allocation2 + $0x8] sm:$0xff] %vm22, 0.0
    %25 = vst.msk [vmem:[#allocation2 + $0x10] sm:$0xff] %vm22, 0.0
    %26 = vst.msk [vmem:[#allocation2 + $0x18] sm:$0xff] %vm22, 0.0
    %27 = vst.msk [vmem:[#allocation2 + $0x20] sm:$0xff] %vm22, 0.0
    %28 = vst.msk [vmem:[#allocation2 + $0x28] sm:$0xff] %vm22, 0.0
    %29 = vst.msk [vmem:[#allocation2 + $0x30] sm:$0xff] %vm22, 0.0
    %30 = vst.msk [vmem:[#allocation2 + $0x38] sm:$0xff] %vm22, 0.0
    %31 = vst.msk [vmem:[#allocation2 + $0x40] sm:$0xff] %vm22, 0.0
    %32 = vst.msk [vmem:[#allocation2 + $0x48] sm:$0xff] %vm22, 0.0
    %33 = vst.msk [vmem:[#allocation2 + $0x50] sm:$0xff] %vm22, 0.0
    %34 = vst.msk [vmem:[#allocation2 + $0x58] sm:$0xff] %vm22, 0.0
    %35 = vst.msk [vmem:[#allocation2 + $0x60] sm:$0xff] %vm22, 0.0
    %36 = vst.msk [vmem:[#allocation2 + $0x68] sm:$0xff] %vm22, 0.0
    %37 = vst.msk [vmem:[#allocation2 + $0x70] sm:$0xff] %vm22, 0.0
    %38 = vst.msk [vmem:[#allocation2 + $0x78] sm:$0xff] %vm22, 0.0
    %39 = vst.msk [vmem:[#allocation2 + $0x80] sm:$0xff] %vm22, 0.0
    %40 = vst.msk [vmem:[#allocation2 + $0x88] sm:$0xff] %vm22, 0.0
    %41 = vst.msk [vmem:[#allocation2 + $0x90] sm:$0xff] %vm22, 0.0
    %42 = vst.msk [vmem:[#allocation2 + $0x98] sm:$0xff] %vm22, 0.0
    %43 = vst.msk [vmem:[#allocation2 + $0xa0] sm:$0xff] %vm22, 0.0
    %44 = vst.msk [vmem:[#allocation2 + $0xa8] sm:$0xff] %vm22, 0.0
    %45 = vst.msk [vmem:[#allocation2 + $0xb0] sm:$0xff] %vm22, 0.0
    %46 = vst.msk [vmem:[#allocation2 + $0xb8] sm:$0xff] %vm22, 0.0
    %47 = vst.msk [vmem:[#allocation2 + $0xc0] sm:$0xff] %vm22, 0.0
    %48 = vst.msk [vmem:[#allocation2 + $0xc8] sm:$0xff] %vm22, 0.0
    %49 = vst.msk [vmem:[#allocation2 + $0xd0] sm:$0xff] %vm22, 0.0
    %50 = vst.msk [vmem:[#allocation2 + $0xd8] sm:$0xff] %vm22, 0.0
    %51 = vst.msk [vmem:[#allocation2 + $0xe0] sm:$0xff] %vm22, 0.0
    %52 = vst.msk [vmem:[#allocation2 + $0xe8] sm:$0xff] %vm22, 0.0
    %53 = vst.msk [vmem:[#allocation2 + $0xf0] sm:$0xff] %vm22, 0.0
    %54 = vst.msk [vmem:[#allocation2 + $0xf8] sm:$0xff] %vm22, 0.0
    %55 = vst.msk [vmem:[#allocation2 + $0x100] sm:$0xff] %vm22, 0.0
    %56 = vst.msk [vmem:[#allocation2 + $0x108] sm:$0xff] %vm22, 0.0
    %57 = vst.msk [vmem:[#allocation2 + $0x110] sm:$0xff] %vm22, 0.0
    %58 = vst.msk [vmem:[#allocation2 + $0x118] sm:$0xff] %vm22, 0.0
    %59 = vst.msk [vmem:[#allocation2 + $0x120] sm:$0xff] %vm22, 0.0
    %60 = vst.msk [vmem:[#allocation2 + $0x128] sm:$0xff] %vm22, 0.0
    %61 = vst.msk [vmem:[#allocation2 + $0x130] sm:$0xff] %vm22, 0.0
    %62 = vst.msk [vmem:[#allocation2 + $0x138] sm:$0xff] %vm22, 0.0
    %63 = vst.msk [vmem:[#allocation2 + $0x140] sm:$0xff] %vm22, 0.0
    %64 = vst.msk [vmem:[#allocation2 + $0x148] sm:$0xff] %vm22, 0.0
    %65 = vst.msk [vmem:[#allocation2 + $0x150] sm:$0xff] %vm22, 0.0
    %66 = vst.msk [vmem:[#allocation2 + $0x158] sm:$0xff] %vm22, 0.0
    %67 = vst.msk [vmem:[#allocation2 + $0x160] sm:$0xff] %vm22, 0.0
    %68 = vst.msk [vmem:[#allocation2 + $0x168] sm:$0xff] %vm22, 0.0
    %69 = vst.msk [vmem:[#allocation2 + $0x170] sm:$0xff] %vm22, 0.0
    %70 = vst.msk [vmem:[#allocation2 + $0x178] sm:$0xff] %vm22, 0.0
    %71 = vst.msk [vmem:[#allocation2 + $0x180] sm:$0xff] %vm22, 0.0
    %72 = vst.msk [vmem:[#allocation2 + $0x188] sm:$0xff] %vm22, 0.0
    %73 = vst.msk [vmem:[#allocation2 + $0x190] sm:$0xff] %vm22, 0.0
    %74 = vst.msk [vmem:[#allocation2 + $0x198] sm:$0xff] %vm22, 0.0
    %75 = vst.msk [vmem:[#allocation2 + $0x1a0] sm:$0xff] %vm22, 0.0
    %76 = vst.msk [vmem:[#allocation2 + $0x1a8] sm:$0xff] %vm22, 0.0
    %77 = vst.msk [vmem:[#allocation2 + $0x1b0] sm:$0xff] %vm22, 0.0
    %78 = vst.msk [vmem:[#allocation2 + $0x1b8] sm:$0xff] %vm22, 0.0
    %79 = vst.msk [vmem:[#allocation2 + $0x1c0] sm:$0xff] %vm22, 0.0
    %80 = vst.msk [vmem:[#allocation2 + $0x1c8] sm:$0xff] %vm22, 0.0
    %81 = vst.msk [vmem:[#allocation2 + $0x1d0] sm:$0xff] %vm22, 0.0
    %82 = vst.msk [vmem:[#allocation2 + $0x1d8] sm:$0xff] %vm22, 0.0
    %83 = vst.msk [vmem:[#allocation2 + $0x1e0] sm:$0xff] %vm22, 0.0
    %84 = vst.msk [vmem:[#allocation2 + $0x1e8] sm:$0xff] %vm22, 0.0
    %85 = vst.msk [vmem:[#allocation2 + $0x1f0] sm:$0xff] %vm22, 0.0
    %86 = vst.msk [vmem:[#allocation2 + $0x1f8] sm:$0xff] %vm22, 0.0
  $region21: #{tpu_custom_call.1} parent=0 // pred_fallthru
    _
  %v87 = vld [vmem:[#allocation2] sm:$0xff]
  %v88 = vld [vmem:[#allocation2 + $0x8] sm:$0xff]
  %v89 = vld [vmem:[#allocation2 + $0x10] sm:$0xff]
  %v90 = vld [vmem:[#allocation2 + $0x18] sm:$0xff]
  %v91 = vld [vmem:[#allocation2 + $0x20] sm:$0xff]
  %v92 = vld [vmem:[#allocation2 + $0x28] sm:$0xff]
  %v93 = vld [vmem:[#allocation2 + $0x30] sm:$0xff]
  %v94 = vld [vmem:[#allocation2 + $0x38] sm:$0xff]
  %v95 = vld [vmem:[#allocation2 + $0x40] sm:$0xff]
  %v96 = vld [vmem:[#allocation2 + $0x48] sm:$0xff]
  %v97 = vld [vmem:[#allocation2 + $0x50] sm:$0xff]
  %v98 = vld [vmem:[#allocation2 + $0x58] sm:$0xff]
  %v99 = vld [vmem:[#allocation2 + $0x60] sm:$0xff]
  %v100 = vld [vmem:[#allocation2 + $0x68] sm:$0xff]
  %v101 = vld [vmem:[#allocation2 + $0x70] sm:$0xff]
  %v102 = vld [vmem:[#allocation2 + $0x78] sm:$0xff]
  %v103 = vld [vmem:[#allocation2 + $0x80] sm:$0xff]
  %v104 = vld [vmem:[#allocation2 + $0x88] sm:$0xff]
  %v105 = vld [vmem:[#allocation2 + $0x90] sm:$0xff]
  %v106 = vld [vmem:[#allocation2 + $0x98] sm:$0xff]
  %v107 = vld [vmem:[#allocation2 + $0xa0] sm:$0xff]
  %v108 = vld [vmem:[#allocation2 + $0xa8] sm:$0xff]
  %v109 = vld [vmem:[#allocation2 + $0xb0] sm:$0xff]
  %v110 = vld [vmem:[#allocation2 + $0xb8] sm:$0xff]
  %v111 = vld [vmem:[#allocation2 + $0xc0] sm:$0xff]
  %v112 = vld [vmem:[#allocation2 + $0xc8] sm:$0xff]
  %v113 = vld [vmem:[#allocation2 + $0xd0] sm:$0xff]
  %v114 = vld [vmem:[#allocation2 + $0xd8] sm:$0xff]
  %v115 = vld [vmem:[#allocation2 + $0xe0] sm:$0xff]
  %v116 = vld [vmem:[#allocation2 + $0xe8] sm:$0xff]
  %v117 = vld [vmem:[#allocation2 + $0xf0] sm:$0xff]
  %v118 = vld [vmem:[#allocation2 + $0xf8] sm:$0xff]
  %v119 = vld [vmem:[#allocation2 + $0x100] sm:$0xff]
  %v120 = vld [vmem:[#allocation2 + $0x108] sm:$0xff]
  %v121 = vld [vmem:[#allocation2 + $0x110] sm:$0xff]
  %v122 = vld [vmem:[#allocation2 + $0x118] sm:$0xff]
  %v123 = vld [vmem:[#allocation2 + $0x120] sm:$0xff]
  %v124 = vld [vmem:[#allocation2 + $0x128] sm:$0xff]
  %v125 = vld [vmem:[#allocation2 + $0x130] sm:$0xff]
  %v126 = vld [vmem:[#allocation2 + $0x138] sm:$0xff]
  %v127 = vld [vmem:[#allocation2 + $0x140] sm:$0xff]
  %v128 = vld [vmem:[#allocation2 + $0x148] sm:$0xff]
  %v129 = vld [vmem:[#allocation2 + $0x150] sm:$0xff]
  %v130 = vld [vmem:[#allocation2 + $0x158] sm:$0xff]
  %v131 = vld [vmem:[#allocation2 + $0x160] sm:$0xff]
  %v132 = vld [vmem:[#allocation2 + $0x168] sm:$0xff]
  %v133 = vld [vmem:[#allocation2 + $0x170] sm:$0xff]
  %v134 = vld [vmem:[#allocation2 + $0x178] sm:$0xff]
  %v135 = vld [vmem:[#allocation2 + $0x180] sm:$0xff]
  %v136 = vld [vmem:[#allocation2 + $0x188] sm:$0xff]
  %v137 = vld [vmem:[#allocation2 + $0x190] sm:$0xff]
  %v138 = vld [vmem:[#allocation2 + $0x198] sm:$0xff]
  %v139 = vld [vmem:[#allocation2 + $0x1a0] sm:$0xff]
  %v140 = vld [vmem:[#allocation2 + $0x1a8] sm:$0xff]
  %v141 = vld [vmem:[#allocation2 + $0x1b0] sm:$0xff]
  %v142 = vld [vmem:[#allocation2 + $0x1b8] sm:$0xff]
  %v143 = vld [vmem:[#allocation2 + $0x1c0] sm:$0xff]
  %v144 = vld [vmem:[#allocation2 + $0x1c8] sm:$0xff]
  %v145 = vld [vmem:[#allocation2 + $0x1d0] sm:$0xff]
  %v146 = vld [vmem:[#allocation2 + $0x1d8] sm:$0xff]
  %v147 = vld [vmem:[#allocation2 + $0x1e0] sm:$0xff]
  %v148 = vld [vmem:[#allocation2 + $0x1e8] sm:$0xff]
  %v149 = vld [vmem:[#allocation2 + $0x1f0] sm:$0xff]
  %v150 = vld [vmem:[#allocation2 + $0x1f8] sm:$0xff]
  %v151 = vld [vmem:[%s0] sm:$0xf]
  %v152 = vld [vmem:[%s0 + $0x4] sm:$0xf]
  %v153 = vld [vmem:[%s0 + $0x8] sm:$0xf]
  %v154 = vld [vmem:[%s0 + $0xc] sm:$0xf]
  %v155 = vld [vmem:[%s0 + $0x10] sm:$0xf]
  %v156 = vld [vmem:[%s0 + $0x14] sm:$0xf]
  %v157 = vld [vmem:[%s0 + $0x18] sm:$0xf]
  %v158 = vld [vmem:[%s0 + $0x1c] sm:$0xf]
  %v159 = vld [vmem:[%s0 + $0x20] sm:$0xf]
  %v160 = vld [vmem:[%s0 + $0x24] sm:$0xf]
  %v161 = vld [vmem:[%s0 + $0x28] sm:$0xf]
  %v162 = vld [vmem:[%s0 + $0x2c] sm:$0xf]
  %v163 = vld [vmem:[%s0 + $0x30] sm:$0xf]
  %v164 = vld [vmem:[%s0 + $0x34] sm:$0xf]
  %v165 = vld [vmem:[%s0 + $0x38] sm:$0xf]
  %v166 = vld [vmem:[%s0 + $0x3c] sm:$0xf]
  %v167 = vld [vmem:[%s0 + $0x40] sm:$0xf]
  %v168 = vld [vmem:[%s0 + $0x44] sm:$0xf]
  %v169 = vld [vmem:[%s0 + $0x48] sm:$0xf]
  %v170 = vld [vmem:[%s0 + $0x4c] sm:$0xf]
  %v171 = vld [vmem:[%s0 + $0x50] sm:$0xf]
  %v172 = vld [vmem:[%s0 + $0x54] sm:$0xf]
  %v173 = vld [vmem:[%s0 + $0x58] sm:$0xf]
  %v174 = vld [vmem:[%s0 + $0x5c] sm:$0xf]
  %v175 = vld [vmem:[%s0 + $0x60] sm:$0xf]
  %v176 = vld [vmem:[%s0 + $0x64] sm:$0xf]
  %v177 = vld [vmem:[%s0 + $0x68] sm:$0xf]
  %v178 = vld [vmem:[%s0 + $0x6c] sm:$0xf]
  %v179 = vld [vmem:[%s0 + $0x70] sm:$0xf]
  %v180 = vld [vmem:[%s0 + $0x74] sm:$0xf]
  %v181 = vld [vmem:[%s0 + $0x78] sm:$0xf]
  %v182 = vld [vmem:[%s0 + $0x7c] sm:$0xf]
  %v183 = vld [vmem:[%s0 + $0x80] sm:$0xf]
  %v184 = vld [vmem:[%s0 + $0x84] sm:$0xf]
  %v185 = vld [vmem:[%s0 + $0x88] sm:$0xf]
  %v186 = vld [vmem:[%s0 + $0x8c] sm:$0xf]
  %v187 = vld [vmem:[%s0 + $0x90] sm:$0xf]
  %v188 = vld [vmem:[%s0 + $0x94] sm:$0xf]
  %v189 = vld [vmem:[%s0 + $0x98] sm:$0xf]
  %v190 = vld [vmem:[%s0 + $0x9c] sm:$0xf]
  %v191 = vld [vmem:[%s0 + $0xa0] sm:$0xf]
  %v192 = vld [vmem:[%s0 + $0xa4] sm:$0xf]
  %v193 = vld [vmem:[%s0 + $0xa8] sm:$0xf]
  %v194 = vld [vmem:[%s0 + $0xac] sm:$0xf]
  %v195 = vld [vmem:[%s0 + $0xb0] sm:$0xf]
  %v196 = vld [vmem:[%s0 + $0xb4] sm:$0xf]
  %v197 = vld [vmem:[%s0 + $0xb8] sm:$0xf]
  %v198 = vld [vmem:[%s0 + $0xbc] sm:$0xf]
  %v199 = vld [vmem:[%s0 + $0xc0] sm:$0xf]
  %v200 = vld [vmem:[%s0 + $0xc4] sm:$0xf]
  %v201 = vld [vmem:[%s0 + $0xc8] sm:$0xf]
  %v202 = vld [vmem:[%s0 + $0xcc] sm:$0xf]
  %v203 = vld [vmem:[%s0 + $0xd0] sm:$0xf]
  %v204 = vld [vmem:[%s0 + $0xd4] sm:$0xf]
  %v205 = vld [vmem:[%s0 + $0xd8] sm:$0xf]
  %v206 = vld [vmem:[%s0 + $0xdc] sm:$0xf]
  %v207 = vld [vmem:[%s0 + $0xe0] sm:$0xf]
  %v208 = vld [vmem:[%s0 + $0xe4] sm:$0xf]
  %v209 = vld [vmem:[%s0 + $0xe8] sm:$0xf]
  %v210 = vld [vmem:[%s0 + $0xec] sm:$0xf]
  %v211 = vld [vmem:[%s0 + $0xf0] sm:$0xf]
  %v212 = vld [vmem:[%s0 + $0xf4] sm:$0xf]
  %v213 = vld [vmem:[%s0 + $0xf8] sm:$0xf]
  %v214 = vld [vmem:[%s0 + $0xfc] sm:$0xf]
  %v215 = vld [vmem:[%s1] sm:$0xf]
  %v280 = vunpack.c.l.b16 %v151
  %v281 = vunpack.c.l.b16 %v152
  %v282 = vunpack.c.l.b16 %v153
  %v283 = vunpack.c.l.b16 %v154
  %v284 = vunpack.c.l.b16 %v155
  %v285 = vunpack.c.l.b16 %v156
  %v286 = vunpack.c.l.b16 %v157
  %v287 = vunpack.c.l.b16 %v158
  %v288 = vunpack.c.l.b16 %v159
  %v289 = vunpack.c.l.b16 %v160
  %v290 = vunpack.c.l.b16 %v161
  %v291 = vunpack.c.l.b16 %v162
  %v292 = vunpack.c.l.b16 %v163
  %v293 = vunpack.c.l.b16 %v164
  %v294 = vunpack.c.l.b16 %v165
  %v295 = vunpack.c.l.b16 %v166
  %v296 = vunpack.c.l.b16 %v167
  %v297 = vunpack.c.l.b16 %v168
  %v298 = vunpack.c.l.b16 %v169
  %v299 = vunpack.c.l.b16 %v170
  %v300 = vunpack.c.l.b16 %v171
  %v301 = vunpack.c.l.b16 %v172
  %v302 = vunpack.c.l.b16 %v173
  %v303 = vunpack.c.l.b16 %v174
  %v304 = vunpack.c.l.b16 %v175
  %v305 = vunpack.c.l.b16 %v176
  %v306 = vunpack.c.l.b16 %v177
  %v307 = vunpack.c.l.b16 %v178
  %v308 = vunpack.c.l.b16 %v179
  %v309 = vunpack.c.l.b16 %v180
  %v310 = vunpack.c.l.b16 %v181
  %v311 = vunpack.c.l.b16 %v182
  %v312 = vunpack.c.l.b16 %v183
  %v313 = vunpack.c.l.b16 %v184
  %v314 = vunpack.c.l.b16 %v185
  %v315 = vunpack.c.l.b16 %v186
  %v316 = vunpack.c.l.b16 %v187
  %v317 = vunpack.c.l.b16 %v188
  %v318 = vunpack.c.l.b16 %v189
  %v319 = vunpack.c.l.b16 %v190
  %v320 = vunpack.c.l.b16 %v191
  %v321 = vunpack.c.l.b16 %v192
  %v322 = vunpack.c.l.b16 %v193
  %v323 = vunpack.c.l.b16 %v194
  %v324 = vunpack.c.l.b16 %v195
  %v325 = vunpack.c.l.b16 %v196
  %v326 = vunpack.c.l.b16 %v197
  %v327 = vunpack.c.l.b16 %v198
  %v328 = vunpack.c.l.b16 %v199
  %v329 = vunpack.c.l.b16 %v200
  %v330 = vunpack.c.l.b16 %v201
  %v331 = vunpack.c.l.b16 %v202
  %v332 = vunpack.c.l.b16 %v203
  %v333 = vunpack.c.l.b16 %v204
  %v334 = vunpack.c.l.b16 %v205
  %v335 = vunpack.c.l.b16 %v206
  %v336 = vunpack.c.l.b16 %v207
  %v337 = vunpack.c.l.b16 %v208
  %v338 = vunpack.c.l.b16 %v209
  %v339 = vunpack.c.l.b16 %v210
  %v340 = vunpack.c.l.b16 %v211
  %v341 = vunpack.c.l.b16 %v212
  %v342 = vunpack.c.l.b16 %v213
  %v343 = vunpack.c.l.b16 %v214
  %v344 = vpack.c.b16 %v281, %v280
  %v345 = vpack.c.b16 %v283, %v282
  %v346 = vpack.c.b16 %v285, %v284
  %v347 = vpack.c.b16 %v287, %v286
  %v348 = vpack.c.b16 %v289, %v288
  %v349 = vpack.c.b16 %v291, %v290
  %v350 = vpack.c.b16 %v293, %v292
  %v351 = vpack.c.b16 %v295, %v294
  %v352 = vpack.c.b16 %v297, %v296
  %v353 = vpack.c.b16 %v299, %v298
  %v354 = vpack.c.b16 %v301, %v300
  %v355 = vpack.c.b16 %v303, %v302
  %v356 = vpack.c.b16 %v305, %v304
  %v357 = vpack.c.b16 %v307, %v306
  %v358 = vpack.c.b16 %v309, %v308
  %v359 = vpack.c.b16 %v311, %v310
  %v360 = vpack.c.b16 %v313, %v312
  %v361 = vpack.c.b16 %v315, %v314
  %v362 = vpack.c.b16 %v317, %v316
  %v363 = vpack.c.b16 %v319, %v318
  %v364 = vpack.c.b16 %v321, %v320
  %v365 = vpack.c.b16 %v323, %v322
  %v366 = vpack.c.b16 %v325, %v324
  %v367 = vpack.c.b16 %v327, %v326
  %v368 = vpack.c.b16 %v329, %v328
  %v369 = vpack.c.b16 %v331, %v330
  %v370 = vpack.c.b16 %v333, %v332
  %v371 = vpack.c.b16 %v335, %v334
  %v372 = vpack.c.b16 %v337, %v336
  %v373 = vpack.c.b16 %v339, %v338
  %v374 = vpack.c.b16 %v341, %v340
  %v375 = vpack.c.b16 %v343, %v342
  %vm376 = vcmask 64512
  %v378 = vsel %vm376, %v344, 0
  %v381 = vsel %vm376, %v345, 0
  %v384 = vsel %vm376, %v346, 0
  %v387 = vsel %vm376, %v347, 0
  %v390 = vsel %vm376, %v348, 0
  %v393 = vsel %vm376, %v349, 0
  %v396 = vsel %vm376, %v350, 0
  %v399 = vsel %vm376, %v351, 0
  %v402 = vsel %vm376, %v352, 0
  %v405 = vsel %vm376, %v353, 0
  %v408 = vsel %vm376, %v354, 0
  %v411 = vsel %vm376, %v355, 0
  %v414 = vsel %vm376, %v356, 0
  %v417 = vsel %vm376, %v357, 0
  %v420 = vsel %vm376, %v358, 0
  %v423 = vsel %vm376, %v359, 0
  %v426 = vsel %vm376, %v360, 0
  %v429 = vsel %vm376, %v361, 0
  %v432 = vsel %vm376, %v362, 0
  %v435 = vsel %vm376, %v363, 0
  %v438 = vsel %vm376, %v364, 0
  %v441 = vsel %vm376, %v365, 0
  %v444 = vsel %vm376, %v366, 0
  %v447 = vsel %vm376, %v367, 0
  %v450 = vsel %vm376, %v368, 0
  %v453 = vsel %vm376, %v369, 0
  %v456 = vsel %vm376, %v370, 0
  %v459 = vsel %vm376, %v371, 0
  %v462 = vsel %vm376, %v372, 0
  %v465 = vsel %vm376, %v373, 0
  %v468 = vsel %vm376, %v374, 0
  %v471 = vsel %vm376, %v375, 0
  %vm473 = vcmask 1043456
  %v475 = vsel %vm473, %v215, 0
  %477 = vmatprep.subr.bf16.mxu0 0
  %478 = vmatpush1.bf16.msra.mxu0 %v475
  %479 = vmatprep.subr.bf16.mxu0 0
  %480 = vmatpush1.bf16.msra.mxu0 0
  %481 = vmatprep.subr.bf16.mxu0 0
  %482 = vmatpush1.bf16.msra.mxu0 0
  %483 = vmatprep.subr.bf16.mxu0 0
  %484 = vmatpush1.bf16.msra.mxu0 0
  %485 = vmatprep.subr.bf16.mxu0 0
  %486 = vmatpush1.bf16.msra.mxu0 0
  %487 = vmatprep.subr.bf16.mxu0 0
  %488 = vmatpush1.bf16.msra.mxu0 0
  %489 = vmatprep.subr.bf16.mxu0 0
  %490 = vmatpush1.bf16.msra.mxu0 0
  %491 = vmatprep.subr.bf16.mxu0 0
  %492 = vmatpush1.bf16.msra.mxu0 0
  %493 = vmatprep.subr.bf16.mxu0 0
  %494 = vmatpush1.bf16.msra.mxu0 0
  %495 = vmatprep.subr.bf16.mxu0 0
  %496 = vmatpush1.bf16.msra.mxu0 0
  %497 = vmatprep.subr.bf16.mxu0 0
  %498 = vmatpush1.bf16.msra.mxu0 0
  %499 = vmatprep.subr.bf16.mxu0 0
  %500 = vmatpush1.bf16.msra.mxu0 0
  %501 = vmatprep.subr.bf16.mxu0 0
  %502 = vmatpush1.bf16.msra.mxu0 0
  %503 = vmatprep.subr.bf16.mxu0 0
  %504 = vmatpush1.bf16.msra.mxu0 0
  %505 = vmatprep.subr.bf16.mxu0 0
  %506 = vmatpush1.bf16.msra.mxu0 0
  %507 = vmatprep.subr.bf16.mxu0 0
  %508 = vmatpush1.bf16.msra.mxu0 0
  %509 = vmatprep.mubr.bf16.mxu0 0
  %510 = vmatmul.mubr.bf16.gmra.mrb[0].mxu0 %v378
  %v511 = vpop.f32.mrb[0].mxu0
  %v512 = vadd.f32 0.0, %v511
  %v513 = vpop.f32.mrb[0].mxu0
  %v514 = vpop.f32.mrb[0].mxu0
  %v515 = vadd.f32 0.0, %v514
  %v516 = vpop.f32.mrb[0].mxu0
  %517 = vmatprep.mubr.bf16.mxu0 0
  %518 = vmatmul.mubr.bf16.gmra.mrb[0].mxu0 %v381
  %v519 = vpop.f32.mrb[0].mxu0
  %v520 = vadd.f32 0.0, %v519
  %v521 = vpop.f32.mrb[0].mxu0
  %v522 = vpop.f32.mrb[0].mxu0
  %v523 = vadd.f32 0.0, %v522
  %v524 = vpop.f32.mrb[0].mxu0
  %525 = vmatprep.mubr.bf16.mxu0 0
  %526 = vmatmul.mubr.bf16.gmra.mrb[0].mxu0 %v384
  %v527 = vpop.f32.mrb[0].mxu0
  %v528 = vadd.f32 0.0, %v527
  %v529 = vpop.f32.mrb[0].mxu0
  %v530 = vpop.f32.mrb[0].mxu0
  %v531 = vadd.f32 0.0, %v530
  %v532 = vpop.f32.mrb[0].mxu0
  %533 = vmatprep.mubr.bf16.mxu0 0
  %534 = vmatmul.mubr.bf16.gmra.mrb[0].mxu0 %v387
  %v535 = vpop.f32.mrb[0].mxu0
  %v536 = vadd.f32 0.0, %v535
  %v537 = vpop.f32.mrb[0].mxu0
  %v538 = vpop.f32.mrb[0].mxu0
  %v539 = vadd.f32 0.0, %v538
  %v540 = vpop.f32.mrb[0].mxu0
  %541 = vmatprep.mubr.bf16.mxu0 0
  %542 = vmatmul.mubr.bf16.gmra.mrb[0].mxu0 %v390
  %v543 = vpop.f32.mrb[0].mxu0
  %v544 = vadd.f32 0.0, %v543
  %v545 = vpop.f32.mrb[0].mxu0
  %v546 = vpop.f32.mrb[0].mxu0
  %v547 = vadd.f32 0.0, %v546
  %v548 = vpop.f32.mrb[0].mxu0
  %549 = vmatprep.mubr.bf16.mxu0 0
  %550 = vmatmul.mubr.bf16.gmra.mrb[0].mxu0 %v393
  %v551 = vpop.f32.mrb[0].mxu0
  %v552 = vadd.f32 0.0, %v551
  %v553 = vpop.f32.mrb[0].mxu0
  %v554 = vpop.f32.mrb[0].mxu0
  %v555 = vadd.f32 0.0, %v554
  %v556 = vpop.f32.mrb[0].mxu0
  %557 = vmatprep.mubr.bf16.mxu0 0
  %558 = vmatmul.mubr.bf16.gmra.mrb[0].mxu0 %v396
  %v559 = vpop.f32.mrb[0].mxu0
  %v560 = vadd.f32 0.0, %v559
  %v561 = vpop.f32.mrb[0].mxu0
  %v562 = vpop.f32.mrb[0].mxu0
  %v563 = vadd.f32 0.0, %v562
  %v564 = vpop.f32.mrb[0].mxu0
  %565 = vmatprep.mubr.bf16.mxu0 0
  %566 = vmatmul.mubr.bf16.gmra.mrb[0].mxu0 %v399
  %v567 = vpop.f32.mrb[0].mxu0
  %v568 = vadd.f32 0.0, %v567
  %v569 = vpop.f32.mrb[0].mxu0
  %v570 = vpop.f32.mrb[0].mxu0
  %v571 = vadd.f32 0.0, %v570
  %v572 = vpop.f32.mrb[0].mxu0
  %573 = vmatprep.mubr.bf16.mxu0 0
  %574 = vmatmul.mubr.bf16.gmra.mrb[0].mxu0 %v402
  %v575 = vpop.f32.mrb[0].mxu0
  %v576 = vadd.f32 0.0, %v575
  %v577 = vpop.f32.mrb[0].mxu0
  %v578 = vpop.f32.mrb[0].mxu0
  %v579 = vadd.f32 0.0, %v578
  %v580 = vpop.f32.mrb[0].mxu0
  %581 = vmatprep.mubr.bf16.mxu0 0
  %582 = vmatmul.mubr.bf16.gmra.mrb[0].mxu0 %v405
  %v583 = vpop.f32.mrb[0].mxu0
  %v584 = vadd.f32 0.0, %v583
  %v585 = vpop.f32.mrb[0].mxu0
  %v586 = vpop.f32.mrb[0].mxu0
  %v587 = vadd.f32 0.0, %v586
  %v588 = vpop.f32.mrb[0].mxu0
  %589 = vmatprep.mubr.bf16.mxu0 0
  %590 = vmatmul.mubr.bf16.gmra.mrb[0].mxu0 %v408
  %v591 = vpop.f32.mrb[0].mxu0
  %v592 = vadd.f32 0.0, %v591
  %v593 = vpop.f32.mrb[0].mxu0
  %v594 = vpop.f32.mrb[0].mxu0
  %v595 = vadd.f32 0.0, %v594
  %v596 = vpop.f32.mrb[0].mxu0
  %597 = vmatprep.mubr.bf16.mxu0 0
  %598 = vmatmul.mubr.bf16.gmra.mrb[0].mxu0 %v411
  %v599 = vpop.f32.mrb[0].mxu0
  %v600 = vadd.f32 0.0, %v599
  %v601 = vpop.f32.mrb[0].mxu0
  %v602 = vpop.f32.mrb[0].mxu0
  %v603 = vadd.f32 0.0, %v602
  %v604 = vpop.f32.mrb[0].mxu0
  %605 = vmatprep.mubr.bf16.mxu0 0
  %606 = vmatmul.mubr.bf16.gmra.mrb[0].mxu0 %v414
  %v607 = vpop.f32.mrb[0].mxu0
  %v608 = vadd.f32 0.0, %v607
  %v609 = vpop.f32.mrb[0].mxu0
  %v610 = vpop.f32.mrb[0].mxu0
  %v611 = vadd.f32 0.0, %v610
  %v612 = vpop.f32.mrb[0].mxu0
  %613 = vmatprep.mubr.bf16.mxu0 0
  %614 = vmatmul.mubr.bf16.gmra.mrb[0].mxu0 %v417
  %v615 = vpop.f32.mrb[0].mxu0
  %v616 = vadd.f32 0.0, %v615
  %v617 = vpop.f32.mrb[0].mxu0
  %v618 = vpop.f32.mrb[0].mxu0
  %v619 = vadd.f32 0.0, %v618
  %v620 = vpop.f32.mrb[0].mxu0
  %621 = vmatprep.mubr.bf16.mxu0 0
  %622 = vmatmul.mubr.bf16.gmra.mrb[0].mxu0 %v420
  %v623 = vpop.f32.mrb[0].mxu0
  %v624 = vadd.f32 0.0, %v623
  %v625 = vpop.f32.mrb[0].mxu0
  %v626 = vpop.f32.mrb[0].mxu0
  %v627 = vadd.f32 0.0, %v626
  %v628 = vpop.f32.mrb[0].mxu0
  %629 = vmatprep.mubr.bf16.mxu0 0
  %630 = vmatmul.mubr.bf16.gmra.mrb[0].mxu0 %v423
  %v631 = vpop.f32.mrb[0].mxu0
  %v632 = vadd.f32 0.0, %v631
  %v633 = vpop.f32.mrb[0].mxu0
  %v634 = vpop.f32.mrb[0].mxu0
  %v635 = vadd.f32 0.0, %v634
  %v636 = vpop.f32.mrb[0].mxu0
  %637 = vmatprep.mubr.bf16.mxu0 0
  %638 = vmatmul.mubr.bf16.gmra.mrb[0].mxu0 %v426
  %v639 = vpop.f32.mrb[0].mxu0
  %v640 = vadd.f32 0.0, %v639
  %v641 = vpop.f32.mrb[0].mxu0
  %v642 = vpop.f32.mrb[0].mxu0
  %v643 = vadd.f32 0.0, %v642
  %v644 = vpop.f32.mrb[0].mxu0
  %645 = vmatprep.mubr.bf16.mxu0 0
  %646 = vmatmul.mubr.bf16.gmra.mrb[0].mxu0 %v429
  %v647 = vpop.f32.mrb[0].mxu0
  %v648 = vadd.f32 0.0, %v647
  %v649 = vpop.f32.mrb[0].mxu0
  %v650 = vpop.f32.mrb[0].mxu0
  %v651 = vadd.f32 0.0, %v650
  %v652 = vpop.f32.mrb[0].mxu0
  %653 = vmatprep.mubr.bf16.mxu0 0
  %654 = vmatmul.mubr.bf16.gmra.mrb[0].mxu0 %v432
  %v655 = vpop.f32.mrb[0].mxu0
  %v656 = vadd.f32 0.0, %v655
  %v657 = vpop.f32.mrb[0].mxu0
  %v658 = vpop.f32.mrb[0].mxu0
  %v659 = vadd.f32 0.0, %v658
  %v660 = vpop.f32.mrb[0].mxu0
  %661 = vmatprep.mubr.bf16.mxu0 0
  %662 = vmatmul.mubr.bf16.gmra.mrb[0].mxu0 %v435
  %v663 = vpop.f32.mrb[0].mxu0
  %v664 = vadd.f32 0.0, %v663
  %v665 = vpop.f32.mrb[0].mxu0
  %v666 = vpop.f32.mrb[0].mxu0
  %v667 = vadd.f32 0.0, %v666
  %v668 = vpop.f32.mrb[0].mxu0
  %669 = vmatprep.mubr.bf16.mxu0 0
  %670 = vmatmul.mubr.bf16.gmra.mrb[0].mxu0 %v438
  %v671 = vpop.f32.mrb[0].mxu0
  %v672 = vadd.f32 0.0, %v671
  %v673 = vpop.f32.mrb[0].mxu0
  %v674 = vpop.f32.mrb[0].mxu0
  %v675 = vadd.f32 0.0, %v674
  %v676 = vpop.f32.mrb[0].mxu0
  %677 = vmatprep.mubr.bf16.mxu0 0
  %678 = vmatmul.mubr.bf16.gmra.mrb[0].mxu0 %v441
  %v679 = vpop.f32.mrb[0].mxu0
  %v680 = vadd.f32 0.0, %v679
  %v681 = vpop.f32.mrb[0].mxu0
  %v682 = vpop.f32.mrb[0].mxu0
  %v683 = vadd.f32 0.0, %v682
  %v684 = vpop.f32.mrb[0].mxu0
  %685 = vmatprep.mubr.bf16.mxu0 0
  %686 = vmatmul.mubr.bf16.gmra.mrb[0].mxu0 %v444
  %v687 = vpop.f32.mrb[0].mxu0
  %v688 = vadd.f32 0.0, %v687
  %v689 = vpop.f32.mrb[0].mxu0
  %v690 = vpop.f32.mrb[0].mxu0
  %v691 = vadd.f32 0.0, %v690
  %v692 = vpop.f32.mrb[0].mxu0
  %693 = vmatprep.mubr.bf16.mxu0 0
  %694 = vmatmul.mubr.bf16.gmra.mrb[0].mxu0 %v447
  %v695 = vpop.f32.mrb[0].mxu0
  %v696 = vadd.f32 0.0, %v695
  %v697 = vpop.f32.mrb[0].mxu0
  %v698 = vpop.f32.mrb[0].mxu0
  %v699 = vadd.f32 0.0, %v698
  %v700 = vpop.f32.mrb[0].mxu0
  %701 = vmatprep.mubr.bf16.mxu0 0
  %702 = vmatmul.mubr.bf16.gmra.mrb[0].mxu0 %v450
  %v703 = vpop.f32.mrb[0].mxu0
  %v704 = vadd.f32 0.0, %v703
  %v705 = vpop.f32.mrb[0].mxu0
  %v706 = vpop.f32.mrb[0].mxu0
  %v707 = vadd.f32 0.0, %v706
  %v708 = vpop.f32.mrb[0].mxu0
  %709 = vmatprep.mubr.bf16.mxu0 0
  %710 = vmatmul.mubr.bf16.gmra.mrb[0].mxu0 %v453
  %v711 = vpop.f32.mrb[0].mxu0
  %v712 = vadd.f32 0.0, %v711
  %v713 = vpop.f32.mrb[0].mxu0
  %v714 = vpop.f32.mrb[0].mxu0
  %v715 = vadd.f32 0.0, %v714
  %v716 = vpop.f32.mrb[0].mxu0
  %717 = vmatprep.mubr.bf16.mxu0 0
  %718 = vmatmul.mubr.bf16.gmra.mrb[0].mxu0 %v456
  %v719 = vpop.f32.mrb[0].mxu0
  %v720 = vadd.f32 0.0, %v719
  %v721 = vpop.f32.mrb[0].mxu0
  %v722 = vpop.f32.mrb[0].mxu0
  %v723 = vadd.f32 0.0, %v722
  %v724 = vpop.f32.mrb[0].mxu0
  %725 = vmatprep.mubr.bf16.mxu0 0
  %726 = vmatmul.mubr.bf16.gmra.mrb[0].mxu0 %v459
  %v727 = vpop.f32.mrb[0].mxu0
  %v728 = vadd.f32 0.0, %v727
  %v729 = vpop.f32.mrb[0].mxu0
  %v730 = vpop.f32.mrb[0].mxu0
  %v731 = vadd.f32 0.0, %v730
  %v732 = vpop.f32.mrb[0].mxu0
  %733 = vmatprep.mubr.bf16.mxu0 0
  %734 = vmatmul.mubr.bf16.gmra.mrb[0].mxu0 %v462
  %v735 = vpop.f32.mrb[0].mxu0
  %v736 = vadd.f32 0.0, %v735
  %v737 = vpop.f32.mrb[0].mxu0
  %v738 = vpop.f32.mrb[0].mxu0
  %v739 = vadd.f32 0.0, %v738
  %v740 = vpop.f32.mrb[0].mxu0
  %741 = vmatprep.mubr.bf16.mxu0 0
  %742 = vmatmul.mubr.bf16.gmra.mrb[0].mxu0 %v465
  %v743 = vpop.f32.mrb[0].mxu0
  %v744 = vadd.f32 0.0, %v743
  %v745 = vpop.f32.mrb[0].mxu0
  %v746 = vpop.f32.mrb[0].mxu0
  %v747 = vadd.f32 0.0, %v746
  %v748 = vpop.f32.mrb[0].mxu0
  %749 = vmatprep.mubr.bf16.mxu0 0
  %750 = vmatmul.mubr.bf16.gmra.mrb[0].mxu0 %v468
  %v751 = vpop.f32.mrb[0].mxu0
  %v752 = vadd.f32 0.0, %v751
  %v753 = vpop.f32.mrb[0].mxu0
  %v754 = vpop.f32.mrb[0].mxu0
  %v755 = vadd.f32 0.0, %v754
  %v756 = vpop.f32.mrb[0].mxu0
  %757 = vmatprep.mubr.bf16.mxu0 0
  %758 = vmatmul.mubr.bf16.gmra.mrb[0].mxu0 %v471
  %v759 = vpop.f32.mrb[0].mxu0
  %v760 = vadd.f32 0.0, %v759
  %v761 = vpop.f32.mrb[0].mxu0
  %v762 = vpop.f32.mrb[0].mxu0
  %v763 = vadd.f32 0.0, %v762
  %v764 = vpop.f32.mrb[0].mxu0
  %765 = vdwg.mxu0
  %v766 = vadd.f32 %v87, %v512
  %v767 = vadd.f32 %v88, %v515
  %v768 = vadd.f32 %v89, %v520
  %v769 = vadd.f32 %v90, %v523
  %v770 = vadd.f32 %v91, %v528
  %v771 = vadd.f32 %v92, %v531
  %v772 = vadd.f32 %v93, %v536
  %v773 = vadd.f32 %v94, %v539
  %v774 = vadd.f32 %v95, %v544
  %v775 = vadd.f32 %v96, %v547
  %v776 = vadd.f32 %v97, %v552
  %v777 = vadd.f32 %v98, %v555
  %v778 = vadd.f32 %v99, %v560
  %v779 = vadd.f32 %v100, %v563
  %v780 = vadd.f32 %v101, %v568
  %v781 = vadd.f32 %v102, %v571
  %v782 = vadd.f32 %v103, %v576
  %v783 = vadd.f32 %v104, %v579
  %v784 = vadd.f32 %v105, %v584
  %v785 = vadd.f32 %v106, %v587
  %v786 = vadd.f32 %v107, %v592
  %v787 = vadd.f32 %v108, %v595
  %v788 = vadd.f32 %v109, %v600
  %v789 = vadd.f32 %v110, %v603
  %v790 = vadd.f32 %v111, %v608
  %v791 = vadd.f32 %v112, %v611
  %v792 = vadd.f32 %v113, %v616
  %v793 = vadd.f32 %v114, %v619
  %v794 = vadd.f32 %v115, %v624
  %v795 = vadd.f32 %v116, %v627
  %v796 = vadd.f32 %v117, %v632
  %v797 = vadd.f32 %v118, %v635
  %v798 = vadd.f32 %v119, %v640
  %v799 = vadd.f32 %v120, %v643
  %v800 = vadd.f32 %v121, %v648
  %v801 = vadd.f32 %v122, %v651
  %v802 = vadd.f32 %v123, %v656
  %v803 = vadd.f32 %v124, %v659
  %v804 = vadd.f32 %v125, %v664
  %v805 = vadd.f32 %v126, %v667
  %v806 = vadd.f32 %v127, %v672
  %v807 = vadd.f32 %v128, %v675
  %v808 = vadd.f32 %v129, %v680
  %v809 = vadd.f32 %v130, %v683
  %v810 = vadd.f32 %v131, %v688
  %v811 = vadd.f32 %v132, %v691
  %v812 = vadd.f32 %v133, %v696
  %v813 = vadd.f32 %v134, %v699
  %v814 = vadd.f32 %v135, %v704
  %v815 = vadd.f32 %v136, %v707
  %v816 = vadd.f32 %v137, %v712
  %v817 = vadd.f32 %v138, %v715
  %v818 = vadd.f32 %v139, %v720
  %v819 = vadd.f32 %v140, %v723
  %v820 = vadd.f32 %v141, %v728
  %v821 = vadd.f32 %v142, %v731
  %v822 = vadd.f32 %v143, %v736
  %v823 = vadd.f32 %v144, %v739
  %v824 = vadd.f32 %v145, %v744
  %v825 = vadd.f32 %v146, %v747
  %v826 = vadd.f32 %v147, %v752
  %v827 = vadd.f32 %v148, %v755
  %v828 = vadd.f32 %v149, %v760
  %v829 = vadd.f32 %v150, %v763
  %vm830 = vcmask 31744
  %831 = vst.msk [vmem:[#allocation2] sm:$0xff] %vm830, %v766
  %832 = vst.msk [vmem:[#allocation2 + $0x8] sm:$0xff] %vm830, %v767
  %833 = vst.msk [vmem:[#allocation2 + $0x10] sm:$0xff] %vm830, %v768
  %834 = vst.msk [vmem:[#allocation2 + $0x18] sm:$0xff] %vm830, %v769
  %835 = vst.msk [vmem:[#allocation2 + $0x20] sm:$0xff] %vm830, %v770
  %836 = vst.msk [vmem:[#allocation2 + $0x28] sm:$0xff] %vm830, %v771
  %837 = vst.msk [vmem:[#allocation2 + $0x30] sm:$0xff] %vm830, %v772
  %838 = vst.msk [vmem:[#allocation2 + $0x38] sm:$0xff] %vm830, %v773
  %839 = vst.msk [vmem:[#allocation2 + $0x40] sm:$0xff] %vm830, %v774
  %840 = vst.msk [vmem:[#allocation2 + $0x48] sm:$0xff] %vm830, %v775
  %841 = vst.msk [vmem:[#allocation2 + $0x50] sm:$0xff] %vm830, %v776
  %842 = vst.msk [vmem:[#allocation2 + $0x58] sm:$0xff] %vm830, %v777
  %843 = vst.msk [vmem:[#allocation2 + $0x60] sm:$0xff] %vm830, %v778
  %844 = vst.msk [vmem:[#allocation2 + $0x68] sm:$0xff] %vm830, %v779
  %845 = vst.msk [vmem:[#allocation2 + $0x70] sm:$0xff] %vm830, %v780
  %846 = vst.msk [vmem:[#allocation2 + $0x78] sm:$0xff] %vm830, %v781
  %847 = vst.msk [vmem:[#allocation2 + $0x80] sm:$0xff] %vm830, %v782
  %848 = vst.msk [vmem:[#allocation2 + $0x88] sm:$0xff] %vm830, %v783
  %849 = vst.msk [vmem:[#allocation2 + $0x90] sm:$0xff] %vm830, %v784
  %850 = vst.msk [vmem:[#allocation2 + $0x98] sm:$0xff] %vm830, %v785
  %851 = vst.msk [vmem:[#allocation2 + $0xa0] sm:$0xff] %vm830, %v786
  %852 = vst.msk [vmem:[#allocation2 + $0xa8] sm:$0xff] %vm830, %v787
  %853 = vst.msk [vmem:[#allocation2 + $0xb0] sm:$0xff] %vm830, %v788
  %854 = vst.msk [vmem:[#allocation2 + $0xb8] sm:$0xff] %vm830, %v789
  %855 = vst.msk [vmem:[#allocation2 + $0xc0] sm:$0xff] %vm830, %v790
  %856 = vst.msk [vmem:[#allocation2 + $0xc8] sm:$0xff] %vm830, %v791
  %857 = vst.msk [vmem:[#allocation2 + $0xd0] sm:$0xff] %vm830, %v792
  %858 = vst.msk [vmem:[#allocation2 + $0xd8] sm:$0xff] %vm830, %v793
  %859 = vst.msk [vmem:[#allocation2 + $0xe0] sm:$0xff] %vm830, %v794
  %860 = vst.msk [vmem:[#allocation2 + $0xe8] sm:$0xff] %vm830, %v795
  %861 = vst.msk [vmem:[#allocation2 + $0xf0] sm:$0xff] %vm830, %v796
  %862 = vst.msk [vmem:[#allocation2 + $0xf8] sm:$0xff] %vm830, %v797
  %863 = vst.msk [vmem:[#allocation2 + $0x100] sm:$0xff] %vm830, %v798
  %864 = vst.msk [vmem:[#allocation2 + $0x108] sm:$0xff] %vm830, %v799
  %865 = vst.msk [vmem:[#allocation2 + $0x110] sm:$0xff] %vm830, %v800
  %866 = vst.msk [vmem:[#allocation2 + $0x118] sm:$0xff] %vm830, %v801
  %867 = vst.msk [vmem:[#allocation2 + $0x120] sm:$0xff] %vm830, %v802
  %868 = vst.msk [vmem:[#allocation2 + $0x128] sm:$0xff] %vm830, %v803
  %869 = vst.msk [vmem:[#allocation2 + $0x130] sm:$0xff] %vm830, %v804
  %870 = vst.msk [vmem:[#allocation2 + $0x138] sm:$0xff] %vm830, %v805
  %871 = vst.msk [vmem:[#allocation2 + $0x140] sm:$0xff] %vm830, %v806
  %872 = vst.msk [vmem:[#allocation2 + $0x148] sm:$0xff] %vm830, %v807
  %873 = vst.msk [vmem:[#allocation2 + $0x150] sm:$0xff] %vm830, %v808
  %874 = vst.msk [vmem:[#allocation2 + $0x158] sm:$0xff] %vm830, %v809
  %875 = vst.msk [vmem:[#allocation2 + $0x160] sm:$0xff] %vm830, %v810
  %876 = vst.msk [vmem:[#allocation2 + $0x168] sm:$0xff] %vm830, %v811
  %877 = vst.msk [vmem:[#allocation2 + $0x170] sm:$0xff] %vm830, %v812
  %878 = vst.msk [vmem:[#allocation2 + $0x178] sm:$0xff] %vm830, %v813
  %879 = vst.msk [vmem:[#allocation2 + $0x180] sm:$0xff] %vm830, %v814
  %880 = vst.msk [vmem:[#allocation2 + $0x188] sm:$0xff] %vm830, %v815
  %881 = vst.msk [vmem:[#allocation2 + $0x190] sm:$0xff] %vm830, %v816
  %882 = vst.msk [vmem:[#allocation2 + $0x198] sm:$0xff] %vm830, %v817
  %883 = vst.msk [vmem:[#allocation2 + $0x1a0] sm:$0xff] %vm830, %v818
  %884 = vst.msk [vmem:[#allocation2 + $0x1a8] sm:$0xff] %vm830, %v819
  %885 = vst.msk [vmem:[#allocation2 + $0x1b0] sm:$0xff] %vm830, %v820
  %886 = vst.msk [vmem:[#allocation2 + $0x1b8] sm:$0xff] %vm830, %v821
  %887 = vst.msk [vmem:[#allocation2 + $0x1c0] sm:$0xff] %vm830, %v822
  %888 = vst.msk [vmem:[#allocation2 + $0x1c8] sm:$0xff] %vm830, %v823
  %889 = vst.msk [vmem:[#allocation2 + $0x1d0] sm:$0xff] %vm830, %v824
  %890 = vst.msk [vmem:[#allocation2 + $0x1d8] sm:$0xff] %vm830, %v825
  %891 = vst.msk [vmem:[#allocation2 + $0x1e0] sm:$0xff] %vm830, %v826
  %892 = vst.msk [vmem:[#allocation2 + $0x1e8] sm:$0xff] %vm830, %v827
  %893 = vst.msk [vmem:[#allocation2 + $0x1f0] sm:$0xff] %vm830, %v828
  %894 = vst.msk [vmem:[#allocation2 + $0x1f8] sm:$0xff] %vm830, %v829
  // Predicated region
  $region22: #{tpu_custom_call.1} parent=0 // pred_check
    %p895 = pneg %p18
  $region23: #{tpu_custom_call.1} parent=0 // pred_check_branch
    %897 = sbr.rel (%p895) target = $region25
  $region24: #{tpu_custom_call.1} parent=0 // pred_region
    %v898 = vld [vmem:[#allocation2] sm:$0xff]
    %v899 = vld [vmem:[#allocation2 + $0x8] sm:$0xff]
    %v900 = vld [vmem:[#allocation2 + $0x10] sm:$0xff]
    %v901 = vld [vmem:[#allocation2 + $0x18] sm:$0xff]
    %v902 = vld [vmem:[#allocation2 + $0x20] sm:$0xff]
    %v903 = vld [vmem:[#allocation2 + $0x28] sm:$0xff]
    %v904 = vld [vmem:[#allocation2 + $0x30] sm:$0xff]
    %v905 = vld [vmem:[#allocation2 + $0x38] sm:$0xff]
    %v906 = vld [vmem:[#allocation2 + $0x40] sm:$0xff]
    %v907 = vld [vmem:[#allocation2 + $0x48] sm:$0xff]
    %v908 = vld [vmem:[#allocation2 + $0x50] sm:$0xff]
    %v909 = vld [vmem:[#allocation2 + $0x58] sm:$0xff]
    %v910 = vld [vmem:[#allocation2 + $0x60] sm:$0xff]
    %v911 = vld [vmem:[#allocation2 + $0x68] sm:$0xff]
    %v912 = vld [vmem:[#allocation2 + $0x70] sm:$0xff]
    %v913 = vld [vmem:[#allocation2 + $0x78] sm:$0xff]
    %v914 = vld [vmem:[#allocation2 + $0x80] sm:$0xff]
    %v915 = vld [vmem:[#allocation2 + $0x88] sm:$0xff]
    %v916 = vld [vmem:[#allocation2 + $0x90] sm:$0xff]
    %v917 = vld [vmem:[#allocation2 + $0x98] sm:$0xff]
    %v918 = vld [vmem:[#allocation2 + $0xa0] sm:$0xff]
    %v919 = vld [vmem:[#allocation2 + $0xa8] sm:$0xff]
    %v920 = vld [vmem:[#allocation2 + $0xb0] sm:$0xff]
    %v921 = vld [vmem:[#allocation2 + $0xb8] sm:$0xff]
    %v922 = vld [vmem:[#allocation2 + $0xc0] sm:$0xff]
    %v923 = vld [vmem:[#allocation2 + $0xc8] sm:$0xff]
    %v924 = vld [vmem:[#allocation2 + $0xd0] sm:$0xff]
    %v925 = vld [vmem:[#allocation2 + $0xd8] sm:$0xff]
    %v926 = vld [vmem:[#allocation2 + $0xe0] sm:$0xff]
    %v927 = vld [vmem:[#allocation2 + $0xe8] sm:$0xff]
    %v928 = vld [vmem:[#allocation2 + $0xf0] sm:$0xff]
    %v929 = vld [vmem:[#allocation2 + $0xf8] sm:$0xff]
    %v930 = vld [vmem:[#allocation2 + $0x100] sm:$0xff]
    %v931 = vld [vmem:[#allocation2 + $0x108] sm:$0xff]
    %v932 = vld [vmem:[#allocation2 + $0x110] sm:$0xff]
    %v933 = vld [vmem:[#allocation2 + $0x118] sm:$0xff]
    %v934 = vld [vmem:[#allocation2 + $0x120] sm:$0xff]
    %v935 = vld [vmem:[#allocation2 + $0x128] sm:$0xff]
    %v936 = vld [vmem:[#allocation2 + $0x130] sm:$0xff]
    %v937 = vld [vmem:[#allocation2 + $0x138] sm:$0xff]
    %v938 = vld [vmem:[#allocation2 + $0x140] sm:$0xff]
    %v939 = vld [vmem:[#allocation2 + $0x148] sm:$0xff]
    %v940 = vld [vmem:[#allocation2 + $0x150] sm:$0xff]
    %v941 = vld [vmem:[#allocation2 + $0x158] sm:$0xff]
    %v942 = vld [vmem:[#allocation2 + $0x160] sm:$0xff]
    %v943 = vld [vmem:[#allocation2 + $0x168] sm:$0xff]
    %v944 = vld [vmem:[#allocation2 + $0x170] sm:$0xff]
    %v945 = vld [vmem:[#allocation2 + $0x178] sm:$0xff]
    %v946 = vld [vmem:[#allocation2 + $0x180] sm:$0xff]
    %v947 = vld [vmem:[#allocation2 + $0x188] sm:$0xff]
    %v948 = vld [vmem:[#allocation2 + $0x190] sm:$0xff]
    %v949 = vld [vmem:[#allocation2 + $0x198] sm:$0xff]
    %v950 = vld [vmem:[#allocation2 + $0x1a0] sm:$0xff]
    %v951 = vld [vmem:[#allocation2 + $0x1a8] sm:$0xff]
    %v952 = vld [vmem:[#allocation2 + $0x1b0] sm:$0xff]
    %v953 = vld [vmem:[#allocation2 + $0x1b8] sm:$0xff]
    %v954 = vld [vmem:[#allocation2 + $0x1c0] sm:$0xff]
    %v955 = vld [vmem:[#allocation2 + $0x1c8] sm:$0xff]
    %v956 = vld [vmem:[#allocation2 + $0x1d0] sm:$0xff]
    %v957 = vld [vmem:[#allocation2 + $0x1d8] sm:$0xff]
    %v958 = vld [vmem:[#allocation2 + $0x1e0] sm:$0xff]
    %v959 = vld [vmem:[#allocation2 + $0x1e8] sm:$0xff]
    %v960 = vld [vmem:[#allocation2 + $0x1f0] sm:$0xff]
    %v961 = vld [vmem:[#allocation2 + $0x1f8] sm:$0xff]
    %v962 = vld [vmem:[%s2] sm:$0x1]
    %v964 = vlaneseq
    %v965 = vshrl.u32 %v964, 7
    %v966 = vsub.s32 0, %v965
    %v967 = vrot.slane %v962, %v966
    %v969 = vmul.f32 %v898, %v967
    %v970 = vmul.f32 %v899, %v967
    %v971 = vmul.f32 %v900, %v967
    %v972 = vmul.f32 %v901, %v967
    %v973 = vmul.f32 %v902, %v967
    %v974 = vmul.f32 %v903, %v967
    %v975 = vmul.f32 %v904, %v967
    %v976 = vmul.f32 %v905, %v967
    %v977 = vmul.f32 %v906, %v967
    %v978 = vmul.f32 %v907, %v967
    %v979 = vmul.f32 %v908, %v967
    %v980 = vmul.f32 %v909, %v967
    %v981 = vmul.f32 %v910, %v967
    %v982 = vmul.f32 %v911, %v967
    %v983 = vmul.f32 %v912, %v967
    %v984 = vmul.f32 %v913, %v967
    %v985 = vmul.f32 %v914, %v967
    %v986 = vmul.f32 %v915, %v967
    %v987 = vmul.f32 %v916, %v967
    %v988 = vmul.f32 %v917, %v967
    %v989 = vmul.f32 %v918, %v967
    %v990 = vmul.f32 %v919, %v967
    %v991 = vmul.f32 %v920, %v967
    %v992 = vmul.f32 %v921, %v967
    %v993 = vmul.f32 %v922, %v967
    %v994 = vmul.f32 %v923, %v967
    %v995 = vmul.f32 %v924, %v967
    %v996 = vmul.f32 %v925, %v967
    %v997 = vmul.f32 %v926, %v967
    %v998 = vmul.f32 %v927, %v967
    %v999 = vmul.f32 %v928, %v967
    %v1000 = vmul.f32 %v929, %v967
    %v1001 = vmul.f32 %v930, %v967
    %v1002 = vmul.f32 %v931, %v967
    %v1003 = vmul.f32 %v932, %v967
    %v1004 = vmul.f32 %v933, %v967
    %v1005 = vmul.f32 %v934, %v967
    %v1006 = vmul.f32 %v935, %v967
    %v1007 = vmul.f32 %v936, %v967
    %v1008 = vmul.f32 %v937, %v967
    %v1009 = vmul.f32 %v938, %v967
    %v1010 = vmul.f32 %v939, %v967
    %v1011 = vmul.f32 %v940, %v967
    %v1012 = vmul.f32 %v941, %v967
    %v1013 = vmul.f32 %v942, %v967
    %v1014 = vmul.f32 %v943, %v967
    %v1015 = vmul.f32 %v944, %v967
    %v1016 = vmul.f32 %v945, %v967
    %v1017 = vmul.f32 %v946, %v967
    %v1018 = vmul.f32 %v947, %v967
    %v1019 = vmul.f32 %v948, %v967
    %v1020 = vmul.f32 %v949, %v967
    %v1021 = vmul.f32 %v950, %v967
    %v1022 = vmul.f32 %v951, %v967
    %v1023 = vmul.f32 %v952, %v967
    %v1024 = vmul.f32 %v953, %v967
    %v1025 = vmul.f32 %v954, %v967
    %v1026 = vmul.f32 %v955, %v967
    %v1027 = vmul.f32 %v956, %v967
    %v1028 = vmul.f32 %v957, %v967
    %v1029 = vmul.f32 %v958, %v967
    %v1030 = vmul.f32 %v959, %v967
    %v1031 = vmul.f32 %v960, %v967
    %v1032 = vmul.f32 %v961, %v967
    %v1033 = vld [vmem:[%s3] sm:$0x1]
    %v1035 = vlaneseq
    %v1036 = vshrl.u32 %v1035, 7
    %v1037 = vsub.s32 0, %v1036
    %v1038 = vrot.slane %v1033, %v1037
    %v1040 = vadd.f32 %v969, %v1038
    %v1041 = vadd.f32 %v970, %v1038
    %v1042 = vadd.f32 %v971, %v1038
    %v1043 = vadd.f32 %v972, %v1038
    %v1044 = vadd.f32 %v973, %v1038
    %v1045 = vadd.f32 %v974, %v1038
    %v1046 = vadd.f32 %v975, %v1038
    %v1047 = vadd.f32 %v976, %v1038
    %v1048 = vadd.f32 %v977, %v1038
    %v1049 = vadd.f32 %v978, %v1038
    %v1050 = vadd.f32 %v979, %v1038
    %v1051 = vadd.f32 %v980, %v1038
    %v1052 = vadd.f32 %v981, %v1038
    %v1053 = vadd.f32 %v982, %v1038
    %v1054 = vadd.f32 %v983, %v1038
    %v1055 = vadd.f32 %v984, %v1038
    %v1056 = vadd.f32 %v985, %v1038
    %v1057 = vadd.f32 %v986, %v1038
    %v1058 = vadd.f32 %v987, %v1038
    %v1059 = vadd.f32 %v988, %v1038
    %v1060 = vadd.f32 %v989, %v1038
    %v1061 = vadd.f32 %v990, %v1038
    %v1062 = vadd.f32 %v991, %v1038
    %v1063 = vadd.f32 %v992, %v1038
    %v1064 = vadd.f32 %v993, %v1038
    %v1065 = vadd.f32 %v994, %v1038
    %v1066 = vadd.f32 %v995, %v1038
    %v1067 = vadd.f32 %v996, %v1038
    %v1068 = vadd.f32 %v997, %v1038
    %v1069 = vadd.f32 %v998, %v1038
    %v1070 = vadd.f32 %v999, %v1038
    %v1071 = vadd.f32 %v1000, %v1038
    %v1072 = vadd.f32 %v1001, %v1038
    %v1073 = vadd.f32 %v1002, %v1038
    %v1074 = vadd.f32 %v1003, %v1038
    %v1075 = vadd.f32 %v1004, %v1038
    %v1076 = vadd.f32 %v1005, %v1038
    %v1077 = vadd.f32 %v1006, %v1038
    %v1078 = vadd.f32 %v1007, %v1038
    %v1079 = vadd.f32 %v1008, %v1038
    %v1080 = vadd.f32 %v1009, %v1038
    %v1081 = vadd.f32 %v1010, %v1038
    %v1082 = vadd.f32 %v1011, %v1038
    %v1083 = vadd.f32 %v1012, %v1038
    %v1084 = vadd.f32 %v1013, %v1038
    %v1085 = vadd.f32 %v1014, %v1038
    %v1086 = vadd.f32 %v1015, %v1038
    %v1087 = vadd.f32 %v1016, %v1038
    %v1088 = vadd.f32 %v1017, %v1038
    %v1089 = vadd.f32 %v1018, %v1038
    %v1090 = vadd.f32 %v1019, %v1038
    %v1091 = vadd.f32 %v1020, %v1038
    %v1092 = vadd.f32 %v1021, %v1038
    %v1093 = vadd.f32 %v1022, %v1038
    %v1094 = vadd.f32 %v1023, %v1038
    %v1095 = vadd.f32 %v1024, %v1038
    %v1096 = vadd.f32 %v1025, %v1038
    %v1097 = vadd.f32 %v1026, %v1038
    %v1098 = vadd.f32 %v1027, %v1038
    %v1099 = vadd.f32 %v1028, %v1038
    %v1100 = vadd.f32 %v1029, %v1038
    %v1101 = vadd.f32 %v1030, %v1038
    %v1102 = vadd.f32 %v1031, %v1038
    %v1103 = vadd.f32 %v1032, %v1038
    %v1104 = vmax.f32 %v1040, 0.0
    %v1105 = vmax.f32 %v1041, 0.0
    %v1106 = vmax.f32 %v1042, 0.0
    %v1107 = vmax.f32 %v1043, 0.0
    %v1108 = vmax.f32 %v1044, 0.0
    %v1109 = vmax.f32 %v1045, 0.0
    %v1110 = vmax.f32 %v1046, 0.0
    %v1111 = vmax.f32 %v1047, 0.0
    %v1112 = vmax.f32 %v1048, 0.0
    %v1113 = vmax.f32 %v1049, 0.0
    %v1114 = vmax.f32 %v1050, 0.0
    %v1115 = vmax.f32 %v1051, 0.0
    %v1116 = vmax.f32 %v1052, 0.0
    %v1117 = vmax.f32 %v1053, 0.0
    %v1118 = vmax.f32 %v1054, 0.0
    %v1119 = vmax.f32 %v1055, 0.0
    %v1120 = vmax.f32 %v1056, 0.0
    %v1121 = vmax.f32 %v1057, 0.0
    %v1122 = vmax.f32 %v1058, 0.0
    %v1123 = vmax.f32 %v1059, 0.0
    %v1124 = vmax.f32 %v1060, 0.0
    %v1125 = vmax.f32 %v1061, 0.0
    %v1126 = vmax.f32 %v1062, 0.0
    %v1127 = vmax.f32 %v1063, 0.0
    %v1128 = vmax.f32 %v1064, 0.0
    %v1129 = vmax.f32 %v1065, 0.0
    %v1130 = vmax.f32 %v1066, 0.0
    %v1131 = vmax.f32 %v1067, 0.0
    %v1132 = vmax.f32 %v1068, 0.0
    %v1133 = vmax.f32 %v1069, 0.0
    %v1134 = vmax.f32 %v1070, 0.0
    %v1135 = vmax.f32 %v1071, 0.0
    %v1136 = vmax.f32 %v1072, 0.0
    %v1137 = vmax.f32 %v1073, 0.0
    %v1138 = vmax.f32 %v1074, 0.0
    %v1139 = vmax.f32 %v1075, 0.0
    %v1140 = vmax.f32 %v1076, 0.0
    %v1141 = vmax.f32 %v1077, 0.0
    %v1142 = vmax.f32 %v1078, 0.0
    %v1143 = vmax.f32 %v1079, 0.0
    %v1144 = vmax.f32 %v1080, 0.0
    %v1145 = vmax.f32 %v1081, 0.0
    %v1146 = vmax.f32 %v1082, 0.0
    %v1147 = vmax.f32 %v1083, 0.0
    %v1148 = vmax.f32 %v1084, 0.0
    %v1149 = vmax.f32 %v1085, 0.0
    %v1150 = vmax.f32 %v1086, 0.0
    %v1151 = vmax.f32 %v1087, 0.0
    %v1152 = vmax.f32 %v1088, 0.0
    %v1153 = vmax.f32 %v1089, 0.0
    %v1154 = vmax.f32 %v1090, 0.0
    %v1155 = vmax.f32 %v1091, 0.0
    %v1156 = vmax.f32 %v1092, 0.0
    %v1157 = vmax.f32 %v1093, 0.0
    %v1158 = vmax.f32 %v1094, 0.0
    %v1159 = vmax.f32 %v1095, 0.0
    %v1160 = vmax.f32 %v1096, 0.0
    %v1161 = vmax.f32 %v1097, 0.0
    %v1162 = vmax.f32 %v1098, 0.0
    %v1163 = vmax.f32 %v1099, 0.0
    %v1164 = vmax.f32 %v1100, 0.0
    %v1165 = vmax.f32 %v1101, 0.0
    %v1166 = vmax.f32 %v1102, 0.0
    %v1167 = vmax.f32 %v1103, 0.0
    %v1168 = vpack.c.bf16 %v1105, %v1104
    %v1169 = vpack.c.bf16 %v1107, %v1106
    %v1170 = vpack.c.bf16 %v1109, %v1108
    %v1171 = vpack.c.bf16 %v1111, %v1110
    %v1172 = vpack.c.bf16 %v1113, %v1112
    %v1173 = vpack.c.bf16 %v1115, %v1114
    %v1174 = vpack.c.bf16 %v1117, %v1116
    %v1175 = vpack.c.bf16 %v1119, %v1118
    %v1176 = vpack.c.bf16 %v1121, %v1120
    %v1177 = vpack.c.bf16 %v1123, %v1122
    %v1178 = vpack.c.bf16 %v1125, %v1124
    %v1179 = vpack.c.bf16 %v1127, %v1126
    %v1180 = vpack.c.bf16 %v1129, %v1128
    %v1181 = vpack.c.bf16 %v1131, %v1130
    %v1182 = vpack.c.bf16 %v1133, %v1132
    %v1183 = vpack.c.bf16 %v1135, %v1134
    %v1184 = vpack.c.bf16 %v1137, %v1136
    %v1185 = vpack.c.bf16 %v1139, %v1138
    %v1186 = vpack.c.bf16 %v1141, %v1140
    %v1187 = vpack.c.bf16 %v1143, %v1142
    %v1188 = vpack.c.bf16 %v1145, %v1144
    %v1189 = vpack.c.bf16 %v1147, %v1146
    %v1190 = vpack.c.bf16 %v1149, %v1148
    %v1191 = vpack.c.bf16 %v1151, %v1150
    %v1192 = vpack.c.bf16 %v1153, %v1152
    %v1193 = vpack.c.bf16 %v1155, %v1154
    %v1194 = vpack.c.bf16 %v1157, %v1156
    %v1195 = vpack.c.bf16 %v1159, %v1158
    %v1196 = vpack.c.bf16 %v1161, %v1160
    %v1197 = vpack.c.bf16 %v1163, %v1162
    %v1198 = vpack.c.bf16 %v1165, %v1164
    %v1199 = vpack.c.bf16 %v1167, %v1166
    %v1232 = vunpack.c.l.b16 %v1168
    %v1233 = vunpack.c.h.b16 %v1168
    %v1234 = vunpack.c.l.b16 %v1169
    %v1235 = vunpack.c.h.b16 %v1169
    %v1236 = vunpack.c.l.b16 %v1170
    %v1237 = vunpack.c.h.b16 %v1170
    %v1238 = vunpack.c.l.b16 %v1171
    %v1239 = vunpack.c.h.b16 %v1171
    %v1240 = vunpack.c.l.b16 %v1172
    %v1241 = vunpack.c.h.b16 %v1172
    %v1242 = vunpack.c.l.b16 %v1173
    %v1243 = vunpack.c.h.b16 %v1173
    %v1244 = vunpack.c.l.b16 %v1174
    %v1245 = vunpack.c.h.b16 %v1174
    %v1246 = vunpack.c.l.b16 %v1175
    %v1247 = vunpack.c.h.b16 %v1175
    %v1248 = vunpack.c.l.b16 %v1176
    %v1249 = vunpack.c.h.b16 %v1176
    %v1250 = vunpack.c.l.b16 %v1177
    %v1251 = vunpack.c.h.b16 %v1177
    %v1252 = vunpack.c.l.b16 %v1178
    %v1253 = vunpack.c.h.b16 %v1178
    %v1254 = vunpack.c.l.b16 %v1179
    %v1255 = vunpack.c.h.b16 %v1179
    %v1256 = vunpack.c.l.b16 %v1180
    %v1257 = vunpack.c.h.b16 %v1180
    %v1258 = vunpack.c.l.b16 %v1181
    %v1259 = vunpack.c.h.b16 %v1181
    %v1260 = vunpack.c.l.b16 %v1182
    %v1261 = vunpack.c.h.b16 %v1182
    %v1262 = vunpack.c.l.b16 %v1183
    %v1263 = vunpack.c.h.b16 %v1183
    %v1264 = vunpack.c.l.b16 %v1184
    %v1265 = vunpack.c.h.b16 %v1184
    %v1266 = vunpack.c.l.b16 %v1185
    %v1267 = vunpack.c.h.b16 %v1185
    %v1268 = vunpack.c.l.b16 %v1186
    %v1269 = vunpack.c.h.b16 %v1186
    %v1270 = vunpack.c.l.b16 %v1187
    %v1271 = vunpack.c.h.b16 %v1187
    %v1272 = vunpack.c.l.b16 %v1188
    %v1273 = vunpack.c.h.b16 %v1188
    %v1274 = vunpack.c.l.b16 %v1189
    %v1275 = vunpack.c.h.b16 %v1189
    %v1276 = vunpack.c.l.b16 %v1190
    %v1277 = vunpack.c.h.b16 %v1190
    %v1278 = vunpack.c.l.b16 %v1191
    %v1279 = vunpack.c.h.b16 %v1191
    %v1280 = vunpack.c.l.b16 %v1192
    %v1281 = vunpack.c.h.b16 %v1192
    %v1282 = vunpack.c.l.b16 %v1193
    %v1283 = vunpack.c.h.b16 %v1193
    %v1284 = vunpack.c.l.b16 %v1194
    %v1285 = vunpack.c.h.b16 %v1194
    %v1286 = vunpack.c.l.b16 %v1195
    %v1287 = vunpack.c.h.b16 %v1195
    %v1288 = vunpack.c.l.b16 %v1196
    %v1289 = vunpack.c.h.b16 %v1196
    %v1290 = vunpack.c.l.b16 %v1197
    %v1291 = vunpack.c.h.b16 %v1197
    %v1292 = vunpack.c.l.b16 %v1198
    %v1293 = vunpack.c.h.b16 %v1198
    %v1294 = vunpack.c.l.b16 %v1199
    %v1295 = vunpack.c.h.b16 %v1199
    %v1296 = vpack.c.b16 %v1232, %v1232
    %v1297 = vpack.c.b16 %v1233, %v1233
    %v1298 = vpack.c.b16 %v1234, %v1234
    %v1299 = vpack.c.b16 %v1235, %v1235
    %v1300 = vpack.c.b16 %v1236, %v1236
    %v1301 = vpack.c.b16 %v1237, %v1237
    %v1302 = vpack.c.b16 %v1238, %v1238
    %v1303 = vpack.c.b16 %v1239, %v1239
    %v1304 = vpack.c.b16 %v1240, %v1240
    %v1305 = vpack.c.b16 %v1241, %v1241
    %v1306 = vpack.c.b16 %v1242, %v1242
    %v1307 = vpack.c.b16 %v1243, %v1243
    %v1308 = vpack.c.b16 %v1244, %v1244
    %v1309 = vpack.c.b16 %v1245, %v1245
    %v1310 = vpack.c.b16 %v1246, %v1246
    %v1311 = vpack.c.b16 %v1247, %v1247
    %v1312 = vpack.c.b16 %v1248, %v1248
    %v1313 = vpack.c.b16 %v1249, %v1249
    %v1314 = vpack.c.b16 %v1250, %v1250
    %v1315 = vpack.c.b16 %v1251, %v1251
    %v1316 = vpack.c.b16 %v1252, %v1252
    %v1317 = vpack.c.b16 %v1253, %v1253
    %v1318 = vpack.c.b16 %v1254, %v1254
    %v1319 = vpack.c.b16 %v1255, %v1255
    %v1320 = vpack.c.b16 %v1256, %v1256
    %v1321 = vpack.c.b16 %v1257, %v1257
    %v1322 = vpack.c.b16 %v1258, %v1258
    %v1323 = vpack.c.b16 %v1259, %v1259
    %v1324 = vpack.c.b16 %v1260, %v1260
    %v1325 = vpack.c.b16 %v1261, %v1261
    %v1326 = vpack.c.b16 %v1262, %v1262
    %v1327 = vpack.c.b16 %v1263, %v1263
    %v1328 = vpack.c.b16 %v1264, %v1264
    %v1329 = vpack.c.b16 %v1265, %v1265
    %v1330 = vpack.c.b16 %v1266, %v1266
    %v1331 = vpack.c.b16 %v1267, %v1267
    %v1332 = vpack.c.b16 %v1268, %v1268
    %v1333 = vpack.c.b16 %v1269, %v1269
    %v1334 = vpack.c.b16 %v1270, %v1270
    %v1335 = vpack.c.b16 %v1271, %v1271
    %v1336 = vpack.c.b16 %v1272, %v1272
    %v1337 = vpack.c.b16 %v1273, %v1273
    %v1338 = vpack.c.b16 %v1274, %v1274
    %v1339 = vpack.c.b16 %v1275, %v1275
    %v1340 = vpack.c.b16 %v1276, %v1276
    %v1341 = vpack.c.b16 %v1277, %v1277
    %v1342 = vpack.c.b16 %v1278, %v1278
    %v1343 = vpack.c.b16 %v1279, %v1279
    %v1344 = vpack.c.b16 %v1280, %v1280
    %v1345 = vpack.c.b16 %v1281, %v1281
    %v1346 = vpack.c.b16 %v1282, %v1282
    %v1347 = vpack.c.b16 %v1283, %v1283
    %v1348 = vpack.c.b16 %v1284, %v1284
    %v1349 = vpack.c.b16 %v1285, %v1285
    %v1350 = vpack.c.b16 %v1286, %v1286
    %v1351 = vpack.c.b16 %v1287, %v1287
    %v1352 = vpack.c.b16 %v1288, %v1288
    %v1353 = vpack.c.b16 %v1289, %v1289
    %v1354 = vpack.c.b16 %v1290, %v1290
    %v1355 = vpack.c.b16 %v1291, %v1291
    %v1356 = vpack.c.b16 %v1292, %v1292
    %v1357 = vpack.c.b16 %v1293, %v1293
    %v1358 = vpack.c.b16 %v1294, %v1294
    %v1359 = vpack.c.b16 %v1295, %v1295
    %vm1424 = vcmask 27648
    %1425 = vst.msk [vmem:[%s4] sm:$0xf] %vm1424, %v1296
    %1426 = vst.msk [vmem:[%s4 + $0x4] sm:$0xf] %vm1424, %v1297
    %1427 = vst.msk [vmem:[%s4 + $0x8] sm:$0xf] %vm1424, %v1298
    %1428 = vst.msk [vmem:[%s4 + $0xc] sm:$0xf] %vm1424, %v1299
    %1429 = vst.msk [vmem:[%s4 + $0x10] sm:$0xf] %vm1424, %v1300
    %1430 = vst.msk [vmem:[%s4 + $0x14] sm:$0xf] %vm1424, %v1301
    %1431 = vst.msk [vmem:[%s4 + $0x18] sm:$0xf] %vm1424, %v1302
    %1432 = vst.msk [vmem:[%s4 + $0x1c] sm:$0xf] %vm1424, %v1303
    %1433 = vst.msk [vmem:[%s4 + $0x20] sm:$0xf] %vm1424, %v1304
    %1434 = vst.msk [vmem:[%s4 + $0x24] sm:$0xf] %vm1424, %v1305
    %1435 = vst.msk [vmem:[%s4 + $0x28] sm:$0xf] %vm1424, %v1306
    %1436 = vst.msk [vmem:[%s4 + $0x2c] sm:$0xf] %vm1424, %v1307
    %1437 = vst.msk [vmem:[%s4 + $0x30] sm:$0xf] %vm1424, %v1308
    %1438 = vst.msk [vmem:[%s4 + $0x34] sm:$0xf] %vm1424, %v1309
    %1439 = vst.msk [vmem:[%s4 + $0x38] sm:$0xf] %vm1424, %v1310
    %1440 = vst.msk [vmem:[%s4 + $0x3c] sm:$0xf] %vm1424, %v1311
    %1441 = vst.msk [vmem:[%s4 + $0x40] sm:$0xf] %vm1424, %v1312
    %1442 = vst.msk [vmem:[%s4 + $0x44] sm:$0xf] %vm1424, %v1313
    %1443 = vst.msk [vmem:[%s4 + $0x48] sm:$0xf] %vm1424, %v1314
    %1444 = vst.msk [vmem:[%s4 + $0x4c] sm:$0xf] %vm1424, %v1315
    %1445 = vst.msk [vmem:[%s4 + $0x50] sm:$0xf] %vm1424, %v1316
    %1446 = vst.msk [vmem:[%s4 + $0x54] sm:$0xf] %vm1424, %v1317
    %1447 = vst.msk [vmem:[%s4 + $0x58] sm:$0xf] %vm1424, %v1318
    %1448 = vst.msk [vmem:[%s4 + $0x5c] sm:$0xf] %vm1424, %v1319
    %1449 = vst.msk [vmem:[%s4 + $0x60] sm:$0xf] %vm1424, %v1320
    %1450 = vst.msk [vmem:[%s4 + $0x64] sm:$0xf] %vm1424, %v1321
    %1451 = vst.msk [vmem:[%s4 + $0x68] sm:$0xf] %vm1424, %v1322
    %1452 = vst.msk [vmem:[%s4 + $0x6c] sm:$0xf] %vm1424, %v1323
    %1453 = vst.msk [vmem:[%s4 + $0x70] sm:$0xf] %vm1424, %v1324
    %1454 = vst.msk [vmem:[%s4 + $0x74] sm:$0xf] %vm1424, %v1325
    %1455 = vst.msk [vmem:[%s4 + $0x78] sm:$0xf] %vm1424, %v1326
    %1456 = vst.msk [vmem:[%s4 + $0x7c] sm:$0xf] %vm1424, %v1327
    %1457 = vst.msk [vmem:[%s4 + $0x80] sm:$0xf] %vm1424, %v1328
    %1458 = vst.msk [vmem:[%s4 + $0x84] sm:$0xf] %vm1424, %v1329
    %1459 = vst.msk [vmem:[%s4 + $0x88] sm:$0xf] %vm1424, %v1330
    %1460 = vst.msk [vmem:[%s4 + $0x8c] sm:$0xf] %vm1424, %v1331
    %1461 = vst.msk [vmem:[%s4 + $0x90] sm:$0xf] %vm1424, %v1332
    %1462 = vst.msk [vmem:[%s4 + $0x94] sm:$0xf] %vm1424, %v1333
    %1463 = vst.msk [vmem:[%s4 + $0x98] sm:$0xf] %vm1424, %v1334
    %1464 = vst.msk [vmem:[%s4 + $0x9c] sm:$0xf] %vm1424, %v1335
    %1465 = vst.msk [vmem:[%s4 + $0xa0] sm:$0xf] %vm1424, %v1336
    %1466 = vst.msk [vmem:[%s4 + $0xa4] sm:$0xf] %vm1424, %v1337
    %1467 = vst.msk [vmem:[%s4 + $0xa8] sm:$0xf] %vm1424, %v1338
    %1468 = vst.msk [vmem:[%s4 + $0xac] sm:$0xf] %vm1424, %v1339
    %1469 = vst.msk [vmem:[%s4 + $0xb0] sm:$0xf] %vm1424, %v1340
    %1470 = vst.msk [vmem:[%s4 + $0xb4] sm:$0xf] %vm1424, %v1341
    %1471 = vst.msk [vmem:[%s4 + $0xb8] sm:$0xf] %vm1424, %v1342
    %1472 = vst.msk [vmem:[%s4 + $0xbc] sm:$0xf] %vm1424, %v1343
    %1473 = vst.msk [vmem:[%s4 + $0xc0] sm:$0xf] %vm1424, %v1344
    %1474 = vst.msk [vmem:[%s4 + $0xc4] sm:$0xf] %vm1424, %v1345
    %1475 = vst.msk [vmem:[%s4 + $0xc8] sm:$0xf] %vm1424, %v1346
    %1476 = vst.msk [vmem:[%s4 + $0xcc] sm:$0xf] %vm1424, %v1347
    %1477 = vst.msk [vmem:[%s4 + $0xd0] sm:$0xf] %vm1424, %v1348
    %1478 = vst.msk [vmem:[%s4 + $0xd4] sm:$0xf] %vm1424, %v1349
    %1479 = vst.msk [vmem:[%s4 + $0xd8] sm:$0xf] %vm1424, %v1350
    %1480 = vst.msk [vmem:[%s4 + $0xdc] sm:$0xf] %vm1424, %v1351
    %1481 = vst.msk [vmem:[%s4 + $0xe0] sm:$0xf] %vm1424, %v1352
    %1482 = vst.msk [vmem:[%s4 + $0xe4] sm:$0xf] %vm1424, %v1353
    %1483 = vst.msk [vmem:[%s4 + $0xe8] sm:$0xf] %vm1424, %v1354
    %1484 = vst.msk [vmem:[%s4 + $0xec] sm:$0xf] %vm1424, %v1355
    %1485 = vst.msk [vmem:[%s4 + $0xf0] sm:$0xf] %vm1424, %v1356
    %1486 = vst.msk [vmem:[%s4 + $0xf4] sm:$0xf] %vm1424, %v1357
    %1487 = vst.msk [vmem:[%s4 + $0xf8] sm:$0xf] %vm1424, %v1358
    %1488 = vst.msk [vmem:[%s4 + $0xfc] sm:$0xf] %vm1424, %v1359
  $region25: #{tpu_custom_call.1} parent=0 // pred_fallthru
    _
  // Predicated region
  $region26: #{tpu_custom_call.1} parent=0 // pred_check
    _
  $region27: #{tpu_custom_call.1} parent=0 // pred_check_branch
    %1490 = sbr.rel (0) target = $region29
  $region28: #{tpu_custom_call.1} parent=0 // pred_region
    _
  $region29: #{tpu_custom_call.1} parent=0 // pred_fallthru
    _
  // Predicated region
  $region30: #{tpu_custom_call.1} parent=0 // pred_check
    _
  $region31: #{tpu_custom_call.1} parent=0 // pred_check_branch
    %1492 = sbr.rel (0) target = $region33
  $region32: #{tpu_custom_call.1} parent=0 // pred_region
    _
  $region33: #{tpu_custom_call.1} parent=0 // pred_fallthru
    _

</llo_original>
